<compile_context>
chip_gen: v6e
topology: v6e:2x2x1
jax: 0.10.0
libtpu: 0.0.40
codegen_flags: <defaults>
</compile_context>

<pallas_src>
from functools import partial

import jax
import jax.numpy as jnp
from jax.experimental import pallas as pl
from jax.experimental.pallas import tpu as pltpu


# --------------------------------------------------------------------------------------
# Fused Mapping kernel: normalize -> project_in -> depth x (linear + relu) -> project_out
# Grid = (num_batch_tiles,), each program handles `tile_b` rows of the batch.
# --------------------------------------------------------------------------------------
def _mapping_kernel(latent_ref, win_ref, bin_ref, wblk_ref, bblk_ref, wout_ref, bout_ref,
                    o_ref, *, depth):
    # Elementwise math in f32 (v5e VPU/EUP have no bf16); MXU operands in bf16.
    x = latent_ref[...].astype(jnp.float32)                       # (TB, L)

    # latent / latent.norm(dim=1, keepdim=True)
    inv_norm = jax.lax.rsqrt(jnp.sum(x * x, axis=-1, keepdims=True))
    x = x * inv_norm

    # project_in (no activation after it in the reference forward)
    h = jnp.dot(x.astype(jnp.bfloat16), win_ref[...],
                preferred_element_type=jnp.float32) + bin_ref[...]

    # depth hidden blocks: relu(Linear(h))   (static unroll; depth is small)
    for i in range(depth):
        h = jnp.dot(h.astype(jnp.bfloat16), wblk_ref[i],
                    preferred_element_type=jnp.float32) + bblk_ref[i]
        h = jnp.maximum(h, 0.0)

    # project_out (no activation)
    out = jnp.dot(h.astype(jnp.bfloat16), wout_ref[...],
                  preferred_element_type=jnp.float32) + bout_ref[...]
    o_ref[...] = out.astype(o_ref.dtype)


def mapping_forward(params, latent, *, tile_b=512, out_dtype=None):
    """Fused forward pass of the Mapping network.  latent: (B, latent_size)."""
    w_in, b_in = params["w_in"], params["b_in"]          # (L, H) bf16, (1, H) f32
    w_blk, b_blk = params["w_blk"], params["b_blk"]      # (depth, H, H) bf16, (depth, 1, H) f32
    w_out, b_out = params["w_out"], params["b_out"]      # (H, O) bf16, (1, O) f32

    B, L = latent.shape
    H = w_in.shape[1]
    O = w_out.shape[1]
    depth = w_blk.shape[0]
    out_dtype = latent.dtype if out_dtype is None else jnp.dtype(out_dtype)

    # Batch tile: large enough to fill MXU rows, never larger than the 8-aligned batch,
    # and (when the batch allows) at least 2 grid steps so v7x's two TCs both get work.
    tb = max(8, min(int(tile_b), ((B + 7) // 8) * 8))
    tb -= tb % 8
    if B > 8 and pl.cdiv(B, tb) < 2:
        tb = max(8, ((pl.cdiv(B, 2) + 7) // 8) * 8)
    nb = pl.cdiv(B, tb)

    # Advisory cost estimate so XLA schedules this custom call sensibly.
    flops = 2 * B * (L * H + depth * H * H + H * O)
    bytes_accessed = (B * L * latent.dtype.itemsize
                      + B * O * out_dtype.itemsize
                      + sum(int(p.size) * p.dtype.itemsize
                            for p in (w_in, b_in, w_blk, b_blk, w_out, b_out)))
    cost = pl.CostEstimate(flops=flops, transcendentals=B, bytes_accessed=bytes_accessed)

    kernel = partial(_mapping_kernel, depth=depth)
    out = pl.pallas_call(
        kernel,
        out_shape=jax.ShapeDtypeStruct((B, O), out_dtype),
        grid=(nb,),
        in_specs=[
            pl.BlockSpec((tb, L), lambda b: (b, 0)),              # latent rows
            pl.BlockSpec((L, H), lambda b: (0, 0)),               # project_in weight (bf16)
            pl.BlockSpec((1, H), lambda b: (0, 0)),               # project_in bias   (f32)
            pl.BlockSpec((depth, H, H), lambda b: (0, 0, 0)),     # block weights     (bf16)
            pl.BlockSpec((depth, 1, H), lambda b: (0, 0, 0)),     # block biases      (f32)
            pl.BlockSpec((H, O), lambda b: (0, 0)),               # project_out weight (bf16)
            pl.BlockSpec((1, O), lambda b: (0, 0)),               # project_out bias   (f32)
        ],
        out_specs=pl.BlockSpec((tb, O), lambda b: (b, 0)),
        compiler_params=pltpu.CompilerParams(dimension_semantics=("parallel",)),
        cost_estimate=cost,
    )(latent, w_in, b_in, w_blk, b_blk, w_out, b_out)
    return out


# --------------------------------------------------------------------------------------
# Pure-JAX reference (for correctness check) and synthetic parameter init
# --------------------------------------------------------------------------------------
def mapping_reference(params, latent):
    f32 = lambda a: a.astype(jnp.float32)
    x = latent / jnp.linalg.norm(latent, axis=1, keepdims=True)
    h = jnp.dot(x, f32(params["w_in"]),
                precision=jax.lax.Precision.HIGHEST) + params["b_in"]
    for i in range(params["w_blk"].shape[0]):
        h = jnp.dot(h, f32(params["w_blk"][i]),
                    precision=jax.lax.Precision.HIGHEST) + params["b_blk"][i]
        h = jnp.maximum(h, 0.0)
    return jnp.dot(h, f32(params["w_out"]),
                   precision=jax.lax.Precision.HIGHEST) + params["b_out"]


def init_params(key, latent_size, output_size, hidden_size, depth):
    # lr_equal(nn.Linear(...)): effective forward weight std = sqrt(2 / fan_in)
    # (equalized-lr runtime scale folded into the stored weight; see TODO above).
    # Weights are stored in bf16 (MXU-native operand), biases stay f32.
    ks = jax.random.split(key, 2 * depth + 4)

    def lin(kw, kb, fan_in, fan_out):
        w = (jax.random.normal(kw, (fan_in, fan_out), jnp.float32)
             * (2.0 / fan_in) ** 0.5).astype(jnp.bfloat16)
        b = jax.random.normal(kb, (1, fan_out), jnp.float32) * 0.1
        return w, b

    w_in, b_in = lin(ks[0], ks[1], latent_size, hidden_size)
    w_blk, b_blk = [], []
    for i in range(depth):
        w, b = lin(ks[2 + 2 * i], ks[3 + 2 * i], hidden_size, hidden_size)
        w_blk.append(w)
        b_blk.append(b)
    w_out, b_out = lin(ks[-2], ks[-1], hidden_size, output_size)
    return dict(w_in=w_in, b_in=b_in,
                w_blk=jnp.stack(w_blk), b_blk=jnp.stack(b_blk),
                w_out=w_out, b_out=b_out)


if __name__ == "__main__":
    key = jax.random.PRNGKey(0)
    k_param, k_lat_small, k_lat_big = jax.random.split(key, 3)

    # Module defaults: latent=512, hidden=128, output=512, depth=8 (lane-dense widths).
    latent_size, hidden_size, output_size, depth = 512, 128, 512, 8
    params = init_params(k_param, latent_size, output_size, hidden_size, depth)

    # Small batch (one sublane tile) — the demo case.
    B_small = 8
    latent_small = jax.random.normal(k_lat_small, (B_small, latent_size), jnp.float32)
    out_small = mapping_forward(params, latent_small)
    jax.block_until_ready(out_small)
    assert out_small.shape == (B_small, output_size) and out_small.dtype == jnp.float32
    assert bool(jnp.all(jnp.isfinite(out_small)))
    ref_small = mapping_reference(params, latent_small)
    assert bool(jnp.allclose(out_small, ref_small, atol=3e-2, rtol=3e-2)), \
        "small-batch mismatch vs JAX reference"

    # Larger batch to exercise the MXU-filling tile and the multi-step parallel grid.
    B_big = 1024
    latent_big = jax.random.normal(k_lat_big, (B_big, latent_size), jnp.float32)
    out_big = mapping_forward(params, latent_big)
    jax.block_until_ready(out_big)
    assert out_big.shape == (B_big, output_size) and out_big.dtype == jnp.float32
    assert bool(jnp.all(jnp.isfinite(out_big)))
    ref_big = mapping_reference(params, latent_big)
    assert bool(jnp.allclose(out_big, ref_big, atol=3e-2, rtol=3e-2)), \
        "large-batch mismatch vs JAX reference"

    print("KERNEL_OK")
</pallas_src>

<mosaic_0001>
module attributes {stable_mosaic.version = 11 : i64} {
  func.func @_mapping_kernel(%arg0: i32, %arg1: memref<8x512xf32, #tpu.memory_space<vmem>>, %arg2: memref<512x128xbf16, #tpu.memory_space<vmem>>, %arg3: memref<1x128xf32, #tpu.memory_space<vmem>>, %arg4: memref<8x128x128xbf16, #tpu.memory_space<vmem>>, %arg5: memref<8x1x128xf32, #tpu.memory_space<vmem>>, %arg6: memref<128x512xbf16, #tpu.memory_space<vmem>>, %arg7: memref<1x512xf32, #tpu.memory_space<vmem>>, %arg8: memref<8x512xf32, #tpu.memory_space<vmem>>) attributes {dimension_semantics = [#tpu.dimension_semantics<parallel>], iteration_bounds = array<i64: 1>, scalar_prefetch = 0 : i64, scratch_operands = 0 : i64, tpu.core_type = #tpu.core_type<tc>, window_params = [{transform_indices = @transform_0, window_bounds = array<i64: 8, 512>}, {pipeline_mode = #tpu.pipeline_mode<synchronous>, transform_indices = @transform_1, window_bounds = array<i64: 512, 128>}, {pipeline_mode = #tpu.pipeline_mode<synchronous>, transform_indices = @transform_2, window_bounds = array<i64: 1, 128>}, {pipeline_mode = #tpu.pipeline_mode<synchronous>, transform_indices = @transform_3, window_bounds = array<i64: 8, 128, 128>}, {pipeline_mode = #tpu.pipeline_mode<synchronous>, transform_indices = @transform_4, window_bounds = array<i64: 8, 1, 128>}, {pipeline_mode = #tpu.pipeline_mode<synchronous>, transform_indices = @transform_5, window_bounds = array<i64: 128, 512>}, {pipeline_mode = #tpu.pipeline_mode<synchronous>, transform_indices = @transform_6, window_bounds = array<i64: 1, 512>}, {transform_indices = @transform_7, window_bounds = array<i64: 8, 512>}]} {
    %c0 = arith.constant 0 : index
    %c0_0 = arith.constant 0 : index
    %0 = vector.load %arg1[%c0, %c0_0] : memref<8x512xf32, #tpu.memory_space<vmem>>, vector<8x512xf32>
    %1 = arith.mulf %0, %0 : vector<8x512xf32>
    %cst = arith.constant dense<0.000000e+00> : vector<8xf32>
    %2 = vector.multi_reduction <add>, %1, %cst [1] : vector<8x512xf32> to vector<8xf32>
    %3 = vector.shape_cast %2 : vector<8xf32> to vector<8x1xf32>
    %4 = math.rsqrt %3 : vector<8x1xf32>
    %5 = vector.broadcast %4 : vector<8x1xf32> to vector<8x512xf32>
    %6 = arith.mulf %0, %5 : vector<8x512xf32>
    %7 = arith.truncf %6 : vector<8x512xf32> to vector<8x512xbf16>
    %c0_1 = arith.constant 0 : index
    %c0_2 = arith.constant 0 : index
    %8 = vector.load %arg2[%c0_1, %c0_2] : memref<512x128xbf16, #tpu.memory_space<vmem>>, vector<512x128xbf16>
    %cst_3 = arith.constant dense<0.000000e+00> : vector<8x128xf32>
    %9 = tpu.matmul %7, %8, %cst_3 {dimension_numbers = #tpu.dot_dimension_numbers<[1], [0], [0], [1], [0, 0, 1, 1], [], []>} : vector<8x512xbf16>, vector<512x128xbf16>, vector<8x128xf32> -> vector<8x128xf32>
    %c0_4 = arith.constant 0 : index
    %c0_5 = arith.constant 0 : index
    %10 = vector.load %arg3[%c0_4, %c0_5] : memref<1x128xf32, #tpu.memory_space<vmem>>, vector<1x128xf32>
    %11 = vector.broadcast %10 : vector<1x128xf32> to vector<8x128xf32>
    %12 = arith.addf %9, %11 : vector<8x128xf32>
    %13 = arith.truncf %12 : vector<8x128xf32> to vector<8x128xbf16>
    %c0_6 = arith.constant 0 : index
    %c0_7 = arith.constant 0 : index
    %c0_8 = arith.constant 0 : index
    %14 = vector.load %arg4[%c0_6, %c0_7, %c0_8] : memref<8x128x128xbf16, #tpu.memory_space<vmem>>, vector<1x128x128xbf16>
    %15 = vector.shape_cast %14 : vector<1x128x128xbf16> to vector<128x128xbf16>
    %cst_9 = arith.constant dense<0.000000e+00> : vector<8x128xf32>
    %16 = tpu.matmul %13, %15, %cst_9 {dimension_numbers = #tpu.dot_dimension_numbers<[1], [0], [0], [1], [0, 0, 1, 1], [], []>} : vector<8x128xbf16>, vector<128x128xbf16>, vector<8x128xf32> -> vector<8x128xf32>
    %c0_10 = arith.constant 0 : index
    %c0_11 = arith.constant 0 : index
    %c0_12 = arith.constant 0 : index
    %17 = vector.load %arg5[%c0_10, %c0_11, %c0_12] : memref<8x1x128xf32, #tpu.memory_space<vmem>>, vector<1x1x128xf32>
    %18 = vector.shape_cast %17 : vector<1x1x128xf32> to vector<1x128xf32>
    %19 = vector.broadcast %18 : vector<1x128xf32> to vector<8x128xf32>
    %20 = arith.addf %16, %19 : vector<8x128xf32>
    %cst_13 = arith.constant 0.000000e+00 : f32
    %21 = vector.broadcast %cst_13 : f32 to vector<8x128xf32>
    %22 = arith.maximumf %20, %21 : vector<8x128xf32>
    %23 = arith.truncf %22 : vector<8x128xf32> to vector<8x128xbf16>
    %c1 = arith.constant 1 : index
    %c0_14 = arith.constant 0 : index
    %c0_15 = arith.constant 0 : index
    %24 = vector.load %arg4[%c1, %c0_14, %c0_15] : memref<8x128x128xbf16, #tpu.memory_space<vmem>>, vector<1x128x128xbf16>
    %25 = vector.shape_cast %24 : vector<1x128x128xbf16> to vector<128x128xbf16>
    %cst_16 = arith.constant dense<0.000000e+00> : vector<8x128xf32>
    %26 = tpu.matmul %23, %25, %cst_16 {dimension_numbers = #tpu.dot_dimension_numbers<[1], [0], [0], [1], [0, 0, 1, 1], [], []>} : vector<8x128xbf16>, vector<128x128xbf16>, vector<8x128xf32> -> vector<8x128xf32>
    %c1_17 = arith.constant 1 : index
    %c0_18 = arith.constant 0 : index
    %c0_19 = arith.constant 0 : index
    %27 = vector.load %arg5[%c1_17, %c0_18, %c0_19] : memref<8x1x128xf32, #tpu.memory_space<vmem>>, vector<1x1x128xf32>
    %28 = vector.shape_cast %27 : vector<1x1x128xf32> to vector<1x128xf32>
    %29 = vector.broadcast %28 : vector<1x128xf32> to vector<8x128xf32>
    %30 = arith.addf %26, %29 : vector<8x128xf32>
    %cst_20 = arith.constant 0.000000e+00 : f32
    %31 = vector.broadcast %cst_20 : f32 to vector<8x128xf32>
    %32 = arith.maximumf %30, %31 : vector<8x128xf32>
    %33 = arith.truncf %32 : vector<8x128xf32> to vector<8x128xbf16>
    %c2 = arith.constant 2 : index
    %c0_21 = arith.constant 0 : index
    %c0_22 = arith.constant 0 : index
    %34 = vector.load %arg4[%c2, %c0_21, %c0_22] : memref<8x128x128xbf16, #tpu.memory_space<vmem>>, vector<1x128x128xbf16>
    %35 = vector.shape_cast %34 : vector<1x128x128xbf16> to vector<128x128xbf16>
    %cst_23 = arith.constant dense<0.000000e+00> : vector<8x128xf32>
    %36 = tpu.matmul %33, %35, %cst_23 {dimension_numbers = #tpu.dot_dimension_numbers<[1], [0], [0], [1], [0, 0, 1, 1], [], []>} : vector<8x128xbf16>, vector<128x128xbf16>, vector<8x128xf32> -> vector<8x128xf32>
    %c2_24 = arith.constant 2 : index
    %c0_25 = arith.constant 0 : index
    %c0_26 = arith.constant 0 : index
    %37 = vector.load %arg5[%c2_24, %c0_25, %c0_26] : memref<8x1x128xf32, #tpu.memory_space<vmem>>, vector<1x1x128xf32>
    %38 = vector.shape_cast %37 : vector<1x1x128xf32> to vector<1x128xf32>
    %39 = vector.broadcast %38 : vector<1x128xf32> to vector<8x128xf32>
    %40 = arith.addf %36, %39 : vector<8x128xf32>
    %cst_27 = arith.constant 0.000000e+00 : f32
    %41 = vector.broadcast %cst_27 : f32 to vector<8x128xf32>
    %42 = arith.maximumf %40, %41 : vector<8x128xf32>
    %43 = arith.truncf %42 : vector<8x128xf32> to vector<8x128xbf16>
    %c3 = arith.constant 3 : index
    %c0_28 = arith.constant 0 : index
    %c0_29 = arith.constant 0 : index
    %44 = vector.load %arg4[%c3, %c0_28, %c0_29] : memref<8x128x128xbf16, #tpu.memory_space<vmem>>, vector<1x128x128xbf16>
    %45 = vector.shape_cast %44 : vector<1x128x128xbf16> to vector<128x128xbf16>
    %cst_30 = arith.constant dense<0.000000e+00> : vector<8x128xf32>
    %46 = tpu.matmul %43, %45, %cst_30 {dimension_numbers = #tpu.dot_dimension_numbers<[1], [0], [0], [1], [0, 0, 1, 1], [], []>} : vector<8x128xbf16>, vector<128x128xbf16>, vector<8x128xf32> -> vector<8x128xf32>
    %c3_31 = arith.constant 3 : index
    %c0_32 = arith.constant 0 : index
    %c0_33 = arith.constant 0 : index
    %47 = vector.load %arg5[%c3_31, %c0_32, %c0_33] : memref<8x1x128xf32, #tpu.memory_space<vmem>>, vector<1x1x128xf32>
    %48 = vector.shape_cast %47 : vector<1x1x128xf32> to vector<1x128xf32>
    %49 = vector.broadcast %48 : vector<1x128xf32> to vector<8x128xf32>
    %50 = arith.addf %46, %49 : vector<8x128xf32>
    %cst_34 = arith.constant 0.000000e+00 : f32
    %51 = vector.broadcast %cst_34 : f32 to vector<8x128xf32>
    %52 = arith.maximumf %50, %51 : vector<8x128xf32>
    %53 = arith.truncf %52 : vector<8x128xf32> to vector<8x128xbf16>
    %c4 = arith.constant 4 : index
    %c0_35 = arith.constant 0 : index
    %c0_36 = arith.constant 0 : index
    %54 = vector.load %arg4[%c4, %c0_35, %c0_36] : memref<8x128x128xbf16, #tpu.memory_space<vmem>>, vector<1x128x128xbf16>
    %55 = vector.shape_cast %54 : vector<1x128x128xbf16> to vector<128x128xbf16>
    %cst_37 = arith.constant dense<0.000000e+00> : vector<8x128xf32>
    %56 = tpu.matmul %53, %55, %cst_37 {dimension_numbers = #tpu.dot_dimension_numbers<[1], [0], [0], [1], [0, 0, 1, 1], [], []>} : vector<8x128xbf16>, vector<128x128xbf16>, vector<8x128xf32> -> vector<8x128xf32>
    %c4_38 = arith.constant 4 : index
    %c0_39 = arith.constant 0 : index
    %c0_40 = arith.constant 0 : index
    %57 = vector.load %arg5[%c4_38, %c0_39, %c0_40] : memref<8x1x128xf32, #tpu.memory_space<vmem>>, vector<1x1x128xf32>
    %58 = vector.shape_cast %57 : vector<1x1x128xf32> to vector<1x128xf32>
    %59 = vector.broadcast %58 : vector<1x128xf32> to vector<8x128xf32>
    %60 = arith.addf %56, %59 : vector<8x128xf32>
    %cst_41 = arith.constant 0.000000e+00 : f32
    %61 = vector.broadcast %cst_41 : f32 to vector<8x128xf32>
    %62 = arith.maximumf %60, %61 : vector<8x128xf32>
    %63 = arith.truncf %62 : vector<8x128xf32> to vector<8x128xbf16>
    %c5 = arith.constant 5 : index
    %c0_42 = arith.constant 0 : index
    %c0_43 = arith.constant 0 : index
    %64 = vector.load %arg4[%c5, %c0_42, %c0_43] : memref<8x128x128xbf16, #tpu.memory_space<vmem>>, vector<1x128x128xbf16>
    %65 = vector.shape_cast %64 : vector<1x128x128xbf16> to vector<128x128xbf16>
    %cst_44 = arith.constant dense<0.000000e+00> : vector<8x128xf32>
    %66 = tpu.matmul %63, %65, %cst_44 {dimension_numbers = #tpu.dot_dimension_numbers<[1], [0], [0], [1], [0, 0, 1, 1], [], []>} : vector<8x128xbf16>, vector<128x128xbf16>, vector<8x128xf32> -> vector<8x128xf32>
    %c5_45 = arith.constant 5 : index
    %c0_46 = arith.constant 0 : index
    %c0_47 = arith.constant 0 : index
    %67 = vector.load %arg5[%c5_45, %c0_46, %c0_47] : memref<8x1x128xf32, #tpu.memory_space<vmem>>, vector<1x1x128xf32>
    %68 = vector.shape_cast %67 : vector<1x1x128xf32> to vector<1x128xf32>
    %69 = vector.broadcast %68 : vector<1x128xf32> to vector<8x128xf32>
    %70 = arith.addf %66, %69 : vector<8x128xf32>
    %cst_48 = arith.constant 0.000000e+00 : f32
    %71 = vector.broadcast %cst_48 : f32 to vector<8x128xf32>
    %72 = arith.maximumf %70, %71 : vector<8x128xf32>
    %73 = arith.truncf %72 : vector<8x128xf32> to vector<8x128xbf16>
    %c6 = arith.constant 6 : index
    %c0_49 = arith.constant 0 : index
    %c0_50 = arith.constant 0 : index
    %74 = vector.load %arg4[%c6, %c0_49, %c0_50] : memref<8x128x128xbf16, #tpu.memory_space<vmem>>, vector<1x128x128xbf16>
    %75 = vector.shape_cast %74 : vector<1x128x128xbf16> to vector<128x128xbf16>
    %cst_51 = arith.constant dense<0.000000e+00> : vector<8x128xf32>
    %76 = tpu.matmul %73, %75, %cst_51 {dimension_numbers = #tpu.dot_dimension_numbers<[1], [0], [0], [1], [0, 0, 1, 1], [], []>} : vector<8x128xbf16>, vector<128x128xbf16>, vector<8x128xf32> -> vector<8x128xf32>
    %c6_52 = arith.constant 6 : index
    %c0_53 = arith.constant 0 : index
    %c0_54 = arith.constant 0 : index
    %77 = vector.load %arg5[%c6_52, %c0_53, %c0_54] : memref<8x1x128xf32, #tpu.memory_space<vmem>>, vector<1x1x128xf32>
    %78 = vector.shape_cast %77 : vector<1x1x128xf32> to vector<1x128xf32>
    %79 = vector.broadcast %78 : vector<1x128xf32> to vector<8x128xf32>
    %80 = arith.addf %76, %79 : vector<8x128xf32>
    %cst_55 = arith.constant 0.000000e+00 : f32
    %81 = vector.broadcast %cst_55 : f32 to vector<8x128xf32>
    %82 = arith.maximumf %80, %81 : vector<8x128xf32>
    %83 = arith.truncf %82 : vector<8x128xf32> to vector<8x128xbf16>
    %c7 = arith.constant 7 : index
    %c0_56 = arith.constant 0 : index
    %c0_57 = arith.constant 0 : index
    %84 = vector.load %arg4[%c7, %c0_56, %c0_57] : memref<8x128x128xbf16, #tpu.memory_space<vmem>>, vector<1x128x128xbf16>
    %85 = vector.shape_cast %84 : vector<1x128x128xbf16> to vector<128x128xbf16>
    %cst_58 = arith.constant dense<0.000000e+00> : vector<8x128xf32>
    %86 = tpu.matmul %83, %85, %cst_58 {dimension_numbers = #tpu.dot_dimension_numbers<[1], [0], [0], [1], [0, 0, 1, 1], [], []>} : vector<8x128xbf16>, vector<128x128xbf16>, vector<8x128xf32> -> vector<8x128xf32>
    %c7_59 = arith.constant 7 : index
    %c0_60 = arith.constant 0 : index
    %c0_61 = arith.constant 0 : index
    %87 = vector.load %arg5[%c7_59, %c0_60, %c0_61] : memref<8x1x128xf32, #tpu.memory_space<vmem>>, vector<1x1x128xf32>
    %88 = vector.shape_cast %87 : vector<1x1x128xf32> to vector<1x128xf32>
    %89 = vector.broadcast %88 : vector<1x128xf32> to vector<8x128xf32>
    %90 = arith.addf %86, %89 : vector<8x128xf32>
    %cst_62 = arith.constant 0.000000e+00 : f32
    %91 = vector.broadcast %cst_62 : f32 to vector<8x128xf32>
    %92 = arith.maximumf %90, %91 : vector<8x128xf32>
    %93 = arith.truncf %92 : vector<8x128xf32> to vector<8x128xbf16>
    %c0_63 = arith.constant 0 : index
    %c0_64 = arith.constant 0 : index
    %94 = vector.load %arg6[%c0_63, %c0_64] : memref<128x512xbf16, #tpu.memory_space<vmem>>, vector<128x512xbf16>
    %cst_65 = arith.constant dense<0.000000e+00> : vector<8x512xf32>
    %95 = tpu.matmul %93, %94, %cst_65 {dimension_numbers = #tpu.dot_dimension_numbers<[1], [0], [0], [1], [0, 0, 1, 1], [], []>} : vector<8x128xbf16>, vector<128x512xbf16>, vector<8x512xf32> -> vector<8x512xf32>
    %c0_66 = arith.constant 0 : index
    %c0_67 = arith.constant 0 : index
    %96 = vector.load %arg7[%c0_66, %c0_67] : memref<1x512xf32, #tpu.memory_space<vmem>>, vector<1x512xf32>
    %97 = vector.broadcast %96 : vector<1x512xf32> to vector<8x512xf32>
    %98 = arith.addf %95, %97 : vector<8x512xf32>
    %c0_68 = arith.constant 0 : index
    %c0_69 = arith.constant 0 : index
    %99 = vector.load %arg8[%c0_68, %c0_69] : memref<8x512xf32, #tpu.memory_space<vmem>>, vector<8x512xf32>
    tpu.vector_store %arg8[%c0_68, %c0_69], %98 {strides = array<i32>} : memref<8x512xf32, #tpu.memory_space<vmem>>, vector<8x512xf32>,
    return
  }
  func.func @transform_0(%arg0: i32) -> (i32, i32) {
    %c0_i32 = arith.constant 0 : i32
    %c0_i32_0 = arith.constant 0 : i32
    return %arg0, %c0_i32 : i32, i32
  }
  func.func @transform_1(%arg0: i32) -> (i32, i32) {
    %c0_i32 = arith.constant 0 : i32
    %c0_i32_0 = arith.constant 0 : i32
    %c0_i32_1 = arith.constant 0 : i32
    return %c0_i32, %c0_i32_0 : i32, i32
  }
  func.func @transform_2(%arg0: i32) -> (i32, i32) {
    %c0_i32 = arith.constant 0 : i32
    %c0_i32_0 = arith.constant 0 : i32
    %c0_i32_1 = arith.constant 0 : i32
    return %c0_i32, %c0_i32_0 : i32, i32
  }
  func.func @transform_3(%arg0: i32) -> (i32, i32, i32) {
    %c0_i32 = arith.constant 0 : i32
    %c0_i32_0 = arith.constant 0 : i32
    %c0_i32_1 = arith.constant 0 : i32
    %c0_i32_2 = arith.constant 0 : i32
    return %c0_i32, %c0_i32_0, %c0_i32_1 : i32, i32, i32
  }
  func.func @transform_4(%arg0: i32) -> (i32, i32, i32) {
    %c0_i32 = arith.constant 0 : i32
    %c0_i32_0 = arith.constant 0 : i32
    %c0_i32_1 = arith.constant 0 : i32
    %c0_i32_2 = arith.constant 0 : i32
    return %c0_i32, %c0_i32_0, %c0_i32_1 : i32, i32, i32
  }
  func.func @transform_5(%arg0: i32) -> (i32, i32) {
    %c0_i32 = arith.constant 0 : i32
    %c0_i32_0 = arith.constant 0 : i32
    %c0_i32_1 = arith.constant 0 : i32
    return %c0_i32, %c0_i32_0 : i32, i32
  }
  func.func @transform_6(%arg0: i32) -> (i32, i32) {
    %c0_i32 = arith.constant 0 : i32
    %c0_i32_0 = arith.constant 0 : i32
    %c0_i32_1 = arith.constant 0 : i32
    return %c0_i32, %c0_i32_0 : i32, i32
  }
  func.func @transform_7(%arg0: i32) -> (i32, i32) {
    %c0_i32 = arith.constant 0 : i32
    %c0_i32_0 = arith.constant 0 : i32
    return %arg0, %c0_i32 : i32, i32
  }
}

</mosaic_0001>

<llo_original>
// kernel: tpu_custom_call.1
$region0: #{tpu_custom_call.1}
  #allocation0 [shape = 'u32[]', space=smem, size = 0x4, offset = 0x4, fixed_abs, tag = 'smem constant byte address 0x4 - core index']
  #allocation1 [shape = 'u32[144,128]{1,0:T(1,128)}', space=vmem, size = 0x12000, scoped, tag = 'internal scratch']
  %s0 = inlined_call_operand.hbm [shape: f32[8,512], index: 0, kind: input, shape index: {}]
  %s1 = inlined_call_operand.hbm [shape: bf16[512,128], index: 1, kind: input, shape index: {}]
  %s2 = inlined_call_operand.vmem [shape: f32[1,128], index: 2, kind: input, shape index: {}]
  %s3 = inlined_call_operand.hbm [shape: bf16[8,128,128], index: 3, kind: input, shape index: {}]
  %s4 = inlined_call_operand.hbm [shape: f32[8,1,128], index: 4, kind: input, shape index: {}]
  %s5 = inlined_call_operand.hbm [shape: bf16[128,512], index: 5, kind: input, shape index: {}]
  %s6 = inlined_call_operand.vmem [shape: f32[1,512], index: 6, kind: input, shape index: {}]
  %s7 = inlined_call_operand.hbm [shape: f32[8,512], index: 7, kind: output, shape index: {}]
  %s8 = sld [smem:[#allocation0]]
  $region58: #{tpu_custom_call.1} parent=0
    _
  %s10 = ssub.s32 1, %s8
  %s11 = scalar_select 0, %s10, %s8
  $region1: #{tpu_custom_call.1} parent=0
    #allocation2 [shape = 'u8[16384]{0}', space=vmem, size = 0x4000, scoped, tag = 'input window, operand 0, single buffered']
    #allocation3 [shape = 's32[1]{0}', space=sflag, size = 0x4, scoped, tag = 'scoped memory for tpu_custom_call.1']
    #allocation4 [shape = 's32[1]{0}', space=sflag, size = 0x4, scoped, tag = 'scoped memory for tpu_custom_call.1']
    #allocation5 [shape = 'u8[131072]{0}', space=vmem, size = 0x20000, scoped, tag = 'input window, operand 1, single buffered']
    #allocation6 [shape = 's32[1]{0}', space=sflag, size = 0x4, scoped, tag = 'scoped memory for tpu_custom_call.1']
    #allocation7 [shape = 'u8[262144]{0}', space=vmem, size = 0x40000, scoped, tag = 'input window, operand 3, single buffered']
    #allocation8 [shape = 'u8[4096]{0}', space=vmem, size = 0x1000, scoped, tag = 'input window, operand 4, single buffered']
    #allocation9 [shape = 's32[1]{0}', space=sflag, size = 0x4, scoped, tag = 'scoped memory for tpu_custom_call.1']
    #allocation10 [shape = 'u8[131072]{0}', space=vmem, size = 0x20000, scoped, tag = 'input window, operand 5, single buffered']
    #allocation11 [shape = 'u8[16384]{0}', space=vmem, size = 0x4000, scoped, tag = 'output window, operand 0, single buffered']
    %12 = vsyncpa [#allocation3], 0
    %13 = vsyncpa [#allocation6], 0
    %14 = vsyncpa [#allocation9], 0
    %15 = vsyncpa [#allocation4], 0
    // Predicated region
    $region2: #{tpu_custom_call.1} parent=1 // pred_check
      _
    $region3: #{tpu_custom_call.1} parent=1 // pred_check_branch
      %17 = sbr.rel (0) target = $region5
    $region4: #{tpu_custom_call.1} parent=1 // pred_region
      %s19 = ssub.s32 512, 512
      %20 = vsyncadd [#allocation3], %s19
      %s22 = sshll.u32 [#allocation2], 4
      %s23 = int_to_ptr.vmem [resolvable:$true] %s22
      %25 = dma.hbm_to_vmem [thread:$0]  %s0, 512, %s23, [#allocation3]
    $region5: #{tpu_custom_call.1} parent=1 // pred_fallthru
      _
    // Predicated region
    $region6: #{tpu_custom_call.1} parent=1 // pred_check
      _
    $region7: #{tpu_custom_call.1} parent=1 // pred_check_branch
      %27 = sbr.rel (0) target = $region9
    $region8: #{tpu_custom_call.1} parent=1 // pred_region
      %s29 = ssub.s32 4096, 4096
      %30 = vsyncadd [#allocation6], %s29
      %s31 = sshll.u32 [#allocation5], 4
      %s32 = int_to_ptr.vmem [resolvable:$true] %s31
      %37 = dma.hbm_to_vmem [thread:$0]  %s1, 4096, %s32, [#allocation6], 64, 64, 4
    $region9: #{tpu_custom_call.1} parent=1 // pred_fallthru
      _
    // Predicated region
    $region10: #{tpu_custom_call.1} parent=1 // pred_check
      _
    $region11: #{tpu_custom_call.1} parent=1 // pred_check_branch
      %39 = sbr.rel (0) target = $region13
    $region12: #{tpu_custom_call.1} parent=1 // pred_region
      _
    $region13: #{tpu_custom_call.1} parent=1 // pred_fallthru
      _
    // Predicated region
    $region14: #{tpu_custom_call.1} parent=1 // pred_check
      _
    $region15: #{tpu_custom_call.1} parent=1 // pred_check_branch
      %41 = sbr.rel (0) target = $region17
    $region16: #{tpu_custom_call.1} parent=1 // pred_region
      %s43 = ssub.s32 8192, 8192
      %44 = vsyncadd [#allocation6], %s43
      %s45 = sshll.u32 [#allocation7], 4
      %s46 = int_to_ptr.vmem [resolvable:$true] %s45
      %51 = dma.hbm_to_vmem [thread:$0]  %s3, 8192, %s46, [#allocation6], 64, 64, 4
    $region17: #{tpu_custom_call.1} parent=1 // pred_fallthru
      _
    // Predicated region
    $region18: #{tpu_custom_call.1} parent=1 // pred_check
      _
    $region19: #{tpu_custom_call.1} parent=1 // pred_check_branch
      %53 = sbr.rel (0) target = $region21
    $region20: #{tpu_custom_call.1} parent=1 // pred_region
      %s55 = ssub.s32 128, 128
      %56 = vsyncadd [#allocation9], %s55
      %s57 = sshll.u32 [#allocation8], 4
      %s58 = int_to_ptr.vmem [resolvable:$true] %s57
      %63 = dma.hbm_to_vmem [thread:$0]  %s4, 128, %s58, [#allocation9], 16, 16, 1
    $region21: #{tpu_custom_call.1} parent=1 // pred_fallthru
      _
    // Predicated region
    $region22: #{tpu_custom_call.1} parent=1 // pred_check
      _
    $region23: #{tpu_custom_call.1} parent=1 // pred_check_branch
      %65 = sbr.rel (0) target = $region25
    $region24: #{tpu_custom_call.1} parent=1 // pred_region
      %s67 = ssub.s32 4096, 4096
      %68 = vsyncadd [#allocation9], %s67
      %s69 = sshll.u32 [#allocation10], 4
      %s70 = int_to_ptr.vmem [resolvable:$true] %s69
      %75 = dma.hbm_to_vmem [thread:$0]  %s5, 4096, %s70, [#allocation9], 256, 256, 16
    $region25: #{tpu_custom_call.1} parent=1 // pred_fallthru
      _
    // Predicated region
    $region26: #{tpu_custom_call.1} parent=1 // pred_check
      _
    $region27: #{tpu_custom_call.1} parent=1 // pred_check_branch
      %77 = sbr.rel (0) target = $region29
    $region28: #{tpu_custom_call.1} parent=1 // pred_region
      _
    $region29: #{tpu_custom_call.1} parent=1 // pred_fallthru
      _
    // Predicated region
    $region30: #{tpu_custom_call.1} parent=1 // pred_check
      _
    $region31: #{tpu_custom_call.1} parent=1 // pred_check_branch
      %79 = sbr.rel (0) target = $region33
    $region32: #{tpu_custom_call.1} parent=1 // pred_region
      %80 = dma.done [#allocation3], 512
    $region33: #{tpu_custom_call.1} parent=1 // pred_fallthru
      _
    // Predicated region
    $region34: #{tpu_custom_call.1} parent=1 // pred_check
      _
    $region35: #{tpu_custom_call.1} parent=1 // pred_check_branch
      %82 = sbr.rel (0) target = $region37
    $region36: #{tpu_custom_call.1} parent=1 // pred_region
      %83 = dma.done [#allocation6], 4096
    $region37: #{tpu_custom_call.1} parent=1 // pred_fallthru
      _
    // Predicated region
    $region38: #{tpu_custom_call.1} parent=1 // pred_check
      _
    $region39: #{tpu_custom_call.1} parent=1 // pred_check_branch
      %85 = sbr.rel (0) target = $region41
    $region40: #{tpu_custom_call.1} parent=1 // pred_region
      %86 = dma.done [#allocation6], 8192
    $region41: #{tpu_custom_call.1} parent=1 // pred_fallthru
      _
    // Predicated region
    $region42: #{tpu_custom_call.1} parent=1 // pred_check
      _
    $region43: #{tpu_custom_call.1} parent=1 // pred_check_branch
      %88 = sbr.rel (0) target = $region45
    $region44: #{tpu_custom_call.1} parent=1 // pred_region
      %89 = dma.done [#allocation9], 128
    $region45: #{tpu_custom_call.1} parent=1 // pred_fallthru
      _
    // Predicated region
    $region46: #{tpu_custom_call.1} parent=1 // pred_check
      _
    $region47: #{tpu_custom_call.1} parent=1 // pred_check_branch
      %91 = sbr.rel (0) target = $region49
    $region48: #{tpu_custom_call.1} parent=1 // pred_region
      %92 = dma.done [#allocation9], 4096
    $region49: #{tpu_custom_call.1} parent=1 // pred_fallthru
      _
    %v94 = vld [vmem:[#allocation2] sm:$0xff]
    %v95 = vld [vmem:[#allocation2 + $0x8] sm:$0xff]
    %v96 = vld [vmem:[#allocation2 + $0x10] sm:$0xff]
    %v97 = vld [vmem:[#allocation2 + $0x18] sm:$0xff]
    %v98 = vmul.f32 %v94, %v94
    %v99 = vmul.f32 %v95, %v95
    %v100 = vmul.f32 %v96, %v96
    %v101 = vmul.f32 %v97, %v97
    %v102 = vadd.f32 %v98, %v99
    %v103 = vadd.f32 %v102, %v100
    %v104 = vadd.f32 %v103, %v101
    %105 = vadd.xlane.f32.xlu0 %v104
    %v106 = vpop.xlane.xlu0 %105
    %v107 = vrsqrt.pop %v106
    %v108 = vmul.f32 %v94, %v107
    %v109 = vmul.f32 %v95, %v107
    %v110 = vmul.f32 %v96, %v107
    %v111 = vmul.f32 %v97, %v107
    %v112 = vpack.c.bf16 %v108, %v108
    %v113 = vpack.c.bf16 %v109, %v109
    %v114 = vpack.c.bf16 %v110, %v110
    %v115 = vpack.c.bf16 %v111, %v111
    %v116 = vld [vmem:[#allocation5] sm:$0xf]
    %v117 = vld [vmem:[#allocation5 + $0x4] sm:$0xf]
    %v118 = vld [vmem:[#allocation5 + $0x8] sm:$0xf]
    %v119 = vld [vmem:[#allocation5 + $0xc] sm:$0xf]
    %v120 = vld [vmem:[#allocation5 + $0x10] sm:$0xf]
    %v121 = vld [vmem:[#allocation5 + $0x14] sm:$0xf]
    %v122 = vld [vmem:[#allocation5 + $0x18] sm:$0xf]
    %v123 = vld [vmem:[#allocation5 + $0x1c] sm:$0xf]
    %v124 = vld [vmem:[#allocation5 + $0x20] sm:$0xf]
    %v125 = vld [vmem:[#allocation5 + $0x24] sm:$0xf]
    %v126 = vld [vmem:[#allocation5 + $0x28] sm:$0xf]
    %v127 = vld [vmem:[#allocation5 + $0x2c] sm:$0xf]
    %v128 = vld [vmem:[#allocation5 + $0x30] sm:$0xf]
    %v129 = vld [vmem:[#allocation5 + $0x34] sm:$0xf]
    %v130 = vld [vmem:[#allocation5 + $0x38] sm:$0xf]
    %v131 = vld [vmem:[#allocation5 + $0x3c] sm:$0xf]
    %v132 = vld [vmem:[#allocation5 + $0x40] sm:$0xf]
    %v133 = vld [vmem:[#allocation5 + $0x44] sm:$0xf]
    %v134 = vld [vmem:[#allocation5 + $0x48] sm:$0xf]
    %v135 = vld [vmem:[#allocation5 + $0x4c] sm:$0xf]
    %v136 = vld [vmem:[#allocation5 + $0x50] sm:$0xf]
    %v137 = vld [vmem:[#allocation5 + $0x54] sm:$0xf]
    %v138 = vld [vmem:[#allocation5 + $0x58] sm:$0xf]
    %v139 = vld [vmem:[#allocation5 + $0x5c] sm:$0xf]
    %v140 = vld [vmem:[#allocation5 + $0x60] sm:$0xf]
    %v141 = vld [vmem:[#allocation5 + $0x64] sm:$0xf]
    %v142 = vld [vmem:[#allocation5 + $0x68] sm:$0xf]
    %v143 = vld [vmem:[#allocation5 + $0x6c] sm:$0xf]
    %v144 = vld [vmem:[#allocation5 + $0x70] sm:$0xf]
    %v145 = vld [vmem:[#allocation5 + $0x74] sm:$0xf]
    %v146 = vld [vmem:[#allocation5 + $0x78] sm:$0xf]
    %v147 = vld [vmem:[#allocation5 + $0x7c] sm:$0xf]
    %v148 = vld [vmem:[#allocation5 + $0x80] sm:$0xf]
    %v149 = vld [vmem:[#allocation5 + $0x84] sm:$0xf]
    %v150 = vld [vmem:[#allocation5 + $0x88] sm:$0xf]
    %v151 = vld [vmem:[#allocation5 + $0x8c] sm:$0xf]
    %v152 = vld [vmem:[#allocation5 + $0x90] sm:$0xf]
    %v153 = vld [vmem:[#allocation5 + $0x94] sm:$0xf]
    %v154 = vld [vmem:[#allocation5 + $0x98] sm:$0xf]
    %v155 = vld [vmem:[#allocation5 + $0x9c] sm:$0xf]
    %v156 = vld [vmem:[#allocation5 + $0xa0] sm:$0xf]
    %v157 = vld [vmem:[#allocation5 + $0xa4] sm:$0xf]
    %v158 = vld [vmem:[#allocation5 + $0xa8] sm:$0xf]
    %v159 = vld [vmem:[#allocation5 + $0xac] sm:$0xf]
    %v160 = vld [vmem:[#allocation5 + $0xb0] sm:$0xf]
    %v161 = vld [vmem:[#allocation5 + $0xb4] sm:$0xf]
    %v162 = vld [vmem:[#allocation5 + $0xb8] sm:$0xf]
    %v163 = vld [vmem:[#allocation5 + $0xbc] sm:$0xf]
    %v164 = vld [vmem:[#allocation5 + $0xc0] sm:$0xf]
    %v165 = vld [vmem:[#allocation5 + $0xc4] sm:$0xf]
    %v166 = vld [vmem:[#allocation5 + $0xc8] sm:$0xf]
    %v167 = vld [vmem:[#allocation5 + $0xcc] sm:$0xf]
    %v168 = vld [vmem:[#allocation5 + $0xd0] sm:$0xf]
    %v169 = vld [vmem:[#allocation5 + $0xd4] sm:$0xf]
    %v170 = vld [vmem:[#allocation5 + $0xd8] sm:$0xf]
    %v171 = vld [vmem:[#allocation5 + $0xdc] sm:$0xf]
    %v172 = vld [vmem:[#allocation5 + $0xe0] sm:$0xf]
    %v173 = vld [vmem:[#allocation5 + $0xe4] sm:$0xf]
    %v174 = vld [vmem:[#allocation5 + $0xe8] sm:$0xf]
    %v175 = vld [vmem:[#allocation5 + $0xec] sm:$0xf]
    %v176 = vld [vmem:[#allocation5 + $0xf0] sm:$0xf]
    %v177 = vld [vmem:[#allocation5 + $0xf4] sm:$0xf]
    %v178 = vld [vmem:[#allocation5 + $0xf8] sm:$0xf]
    %v179 = vld [vmem:[#allocation5 + $0xfc] sm:$0xf]
    %v180 = vld [vmem:[%s2] sm:$0x1]
    %v182 = vlaneseq
    %v183 = vshrl.u32 %v182, 7
    %v184 = vsub.s32 0, %v183
    %v185 = vrot.slane %v180, %v184
    %v251 = vunpack.c.l.b16 %v116
    %v252 = vunpack.c.l.b16 %v117
    %v253 = vunpack.c.l.b16 %v118
    %v254 = vunpack.c.l.b16 %v119
    %v255 = vunpack.c.l.b16 %v120
    %v256 = vunpack.c.l.b16 %v121
    %v257 = vunpack.c.l.b16 %v122
    %v258 = vunpack.c.l.b16 %v123
    %v259 = vunpack.c.l.b16 %v124
    %v260 = vunpack.c.l.b16 %v125
    %v261 = vunpack.c.l.b16 %v126
    %v262 = vunpack.c.l.b16 %v127
    %v263 = vunpack.c.l.b16 %v128
    %v264 = vunpack.c.l.b16 %v129
    %v265 = vunpack.c.l.b16 %v130
    %v266 = vunpack.c.l.b16 %v131
    %v267 = vunpack.c.l.b16 %v132
    %v268 = vunpack.c.l.b16 %v133
    %v269 = vunpack.c.l.b16 %v134
    %v270 = vunpack.c.l.b16 %v135
    %v271 = vunpack.c.l.b16 %v136
    %v272 = vunpack.c.l.b16 %v137
    %v273 = vunpack.c.l.b16 %v138
    %v274 = vunpack.c.l.b16 %v139
    %v275 = vunpack.c.l.b16 %v140
    %v276 = vunpack.c.l.b16 %v141
    %v277 = vunpack.c.l.b16 %v142
    %v278 = vunpack.c.l.b16 %v143
    %v279 = vunpack.c.l.b16 %v144
    %v280 = vunpack.c.l.b16 %v145
    %v281 = vunpack.c.l.b16 %v146
    %v282 = vunpack.c.l.b16 %v147
    %v283 = vunpack.c.l.b16 %v148
    %v284 = vunpack.c.l.b16 %v149
    %v285 = vunpack.c.l.b16 %v150
    %v286 = vunpack.c.l.b16 %v151
    %v287 = vunpack.c.l.b16 %v152
    %v288 = vunpack.c.l.b16 %v153
    %v289 = vunpack.c.l.b16 %v154
    %v290 = vunpack.c.l.b16 %v155
    %v291 = vunpack.c.l.b16 %v156
    %v292 = vunpack.c.l.b16 %v157
    %v293 = vunpack.c.l.b16 %v158
    %v294 = vunpack.c.l.b16 %v159
    %v295 = vunpack.c.l.b16 %v160
    %v296 = vunpack.c.l.b16 %v161
    %v297 = vunpack.c.l.b16 %v162
    %v298 = vunpack.c.l.b16 %v163
    %v299 = vunpack.c.l.b16 %v164
    %v300 = vunpack.c.l.b16 %v165
    %v301 = vunpack.c.l.b16 %v166
    %v302 = vunpack.c.l.b16 %v167
    %v303 = vunpack.c.l.b16 %v168
    %v304 = vunpack.c.l.b16 %v169
    %v305 = vunpack.c.l.b16 %v170
    %v306 = vunpack.c.l.b16 %v171
    %v307 = vunpack.c.l.b16 %v172
    %v308 = vunpack.c.l.b16 %v173
    %v309 = vunpack.c.l.b16 %v174
    %v310 = vunpack.c.l.b16 %v175
    %v311 = vunpack.c.l.b16 %v176
    %v312 = vunpack.c.l.b16 %v177
    %v313 = vunpack.c.l.b16 %v178
    %v314 = vunpack.c.l.b16 %v179
    %v315 = vpack.c.b16 %v252, %v251
    %v316 = vpack.c.b16 %v254, %v253
    %v317 = vpack.c.b16 %v256, %v255
    %v318 = vpack.c.b16 %v258, %v257
    %v319 = vpack.c.b16 %v260, %v259
    %v320 = vpack.c.b16 %v262, %v261
    %v321 = vpack.c.b16 %v264, %v263
    %v322 = vpack.c.b16 %v266, %v265
    %v323 = vpack.c.b16 %v268, %v267
    %v324 = vpack.c.b16 %v270, %v269
    %v325 = vpack.c.b16 %v272, %v271
    %v326 = vpack.c.b16 %v274, %v273
    %v327 = vpack.c.b16 %v276, %v275
    %v328 = vpack.c.b16 %v278, %v277
    %v329 = vpack.c.b16 %v280, %v279
    %v330 = vpack.c.b16 %v282, %v281
    %v331 = vpack.c.b16 %v284, %v283
    %v332 = vpack.c.b16 %v286, %v285
    %v333 = vpack.c.b16 %v288, %v287
    %v334 = vpack.c.b16 %v290, %v289
    %v335 = vpack.c.b16 %v292, %v291
    %v336 = vpack.c.b16 %v294, %v293
    %v337 = vpack.c.b16 %v296, %v295
    %v338 = vpack.c.b16 %v298, %v297
    %v339 = vpack.c.b16 %v300, %v299
    %v340 = vpack.c.b16 %v302, %v301
    %v341 = vpack.c.b16 %v304, %v303
    %v342 = vpack.c.b16 %v306, %v305
    %v343 = vpack.c.b16 %v308, %v307
    %v344 = vpack.c.b16 %v310, %v309
    %v345 = vpack.c.b16 %v312, %v311
    %v346 = vpack.c.b16 %v314, %v313
    %379 = vmatprep.subr.bf16.mxu0 0
    %380 = vmatpush1.bf16.msra.mxu0 %v322
    %381 = vmatprep.subr.bf16.mxu0 0
    %382 = vmatpush1.bf16.msra.mxu0 %v321
    %383 = vmatprep.subr.bf16.mxu0 0
    %384 = vmatpush1.bf16.msra.mxu0 %v320
    %385 = vmatprep.subr.bf16.mxu0 0
    %386 = vmatpush1.bf16.msra.mxu0 %v319
    %387 = vmatprep.subr.bf16.mxu0 0
    %388 = vmatpush1.bf16.msra.mxu0 %v318
    %389 = vmatprep.subr.bf16.mxu0 0
    %390 = vmatpush1.bf16.msra.mxu0 %v317
    %391 = vmatprep.subr.bf16.mxu0 0
    %392 = vmatpush1.bf16.msra.mxu0 %v316
    %393 = vmatprep.subr.bf16.mxu0 0
    %394 = vmatpush1.bf16.msra.mxu0 %v315
    %395 = vmatprep.subr.bf16.mxu0 0
    %396 = vmatpush2.bf16.msra.mxu0 %v330
    %397 = vmatprep.subr.bf16.mxu0 0
    %398 = vmatpush2.bf16.msra.mxu0 %v329
    %399 = vmatprep.subr.bf16.mxu0 0
    %400 = vmatpush2.bf16.msra.mxu0 %v328
    %401 = vmatprep.subr.bf16.mxu0 0
    %402 = vmatpush2.bf16.msra.mxu0 %v327
    %403 = vmatprep.subr.bf16.mxu0 0
    %404 = vmatpush2.bf16.msra.mxu0 %v326
    %405 = vmatprep.subr.bf16.mxu0 0
    %406 = vmatpush2.bf16.msra.mxu0 %v325
    %407 = vmatprep.subr.bf16.mxu0 0
    %408 = vmatpush2.bf16.msra.mxu0 %v324
    %409 = vmatprep.subr.bf16.mxu0 0
    %410 = vmatpush2.bf16.msra.mxu0 %v323
    %411 = vmatprep.mubr.bf16.mxu0 %v113
    %412 = vmatmul.mubr.bf16.gmra.mxu0 %v112
    %v413 = vpop.f32.mrf.mxu0
    %v414 = vadd.f32 %v185, %v413
    %v415 = vpop.f32.mrf.mxu0
    %v416 = vpop.f32.mrf.mxu0
    %v417 = vpop.f32.mrf.mxu0
    %418 = vdwg.mxu0
    %419 = vmatprep.subr.bf16.mxu0 0
    %420 = vmatpush1.bf16.msra.mxu0 %v338
    %421 = vmatprep.subr.bf16.mxu0 0
    %422 = vmatpush1.bf16.msra.mxu0 %v337
    %423 = vmatprep.subr.bf16.mxu0 0
    %424 = vmatpush1.bf16.msra.mxu0 %v336
    %425 = vmatprep.subr.bf16.mxu0 0
    %426 = vmatpush1.bf16.msra.mxu0 %v335
    %427 = vmatprep.subr.bf16.mxu0 0
    %428 = vmatpush1.bf16.msra.mxu0 %v334
    %429 = vmatprep.subr.bf16.mxu0 0
    %430 = vmatpush1.bf16.msra.mxu0 %v333
    %431 = vmatprep.subr.bf16.mxu0 0
    %432 = vmatpush1.bf16.msra.mxu0 %v332
    %433 = vmatprep.subr.bf16.mxu0 0
    %434 = vmatpush1.bf16.msra.mxu0 %v331
    %435 = vmatprep.subr.bf16.mxu0 0
    %436 = vmatpush2.bf16.msra.mxu0 %v346
    %437 = vmatprep.subr.bf16.mxu0 0
    %438 = vmatpush2.bf16.msra.mxu0 %v345
    %439 = vmatprep.subr.bf16.mxu0 0
    %440 = vmatpush2.bf16.msra.mxu0 %v344
    %441 = vmatprep.subr.bf16.mxu0 0
    %442 = vmatpush2.bf16.msra.mxu0 %v343
    %443 = vmatprep.subr.bf16.mxu0 0
    %444 = vmatpush2.bf16.msra.mxu0 %v342
    %445 = vmatprep.subr.bf16.mxu0 0
    %446 = vmatpush2.bf16.msra.mxu0 %v341
    %447 = vmatprep.subr.bf16.mxu0 0
    %448 = vmatpush2.bf16.msra.mxu0 %v340
    %449 = vmatprep.subr.bf16.mxu0 0
    %450 = vmatpush2.bf16.msra.mxu0 %v339
    %451 = vmatprep.mubr.bf16.mxu0 %v115
    %452 = vmatmul.mubr.bf16.gmra.mxu0 %v114
    %v453 = vpop.f32.mrf.mxu0
    %v454 = vadd.f32 %v414, %v453
    %v455 = vpop.f32.mrf.mxu0
    %v456 = vpop.f32.mrf.mxu0
    %v457 = vpop.f32.mrf.mxu0
    %458 = vdwg.mxu0
    %v459 = vpack.c.bf16 %v454, %v454
    %v460 = vld [vmem:[#allocation7] sm:$0xf]
    %v461 = vld [vmem:[#allocation7 + $0x4] sm:$0xf]
    %v462 = vld [vmem:[#allocation7 + $0x8] sm:$0xf]
    %v463 = vld [vmem:[#allocation7 + $0xc] sm:$0xf]
    %v464 = vld [vmem:[#allocation7 + $0x10] sm:$0xf]
    %v465 = vld [vmem:[#allocation7 + $0x14] sm:$0xf]
    %v466 = vld [vmem:[#allocation7 + $0x18] sm:$0xf]
    %v467 = vld [vmem:[#allocation7 + $0x1c] sm:$0xf]
    %v468 = vld [vmem:[#allocation7 + $0x20] sm:$0xf]
    %v469 = vld [vmem:[#allocation7 + $0x24] sm:$0xf]
    %v470 = vld [vmem:[#allocation7 + $0x28] sm:$0xf]
    %v471 = vld [vmem:[#allocation7 + $0x2c] sm:$0xf]
    %v472 = vld [vmem:[#allocation7 + $0x30] sm:$0xf]
    %v473 = vld [vmem:[#allocation7 + $0x34] sm:$0xf]
    %v474 = vld [vmem:[#allocation7 + $0x38] sm:$0xf]
    %v475 = vld [vmem:[#allocation7 + $0x3c] sm:$0xf]
    %v476 = vld [vmem:[#allocation8] sm:$0x1]
    %v478 = vlaneseq
    %v479 = vshrl.u32 %v478, 7
    %v480 = vsub.s32 0, %v479
    %v481 = vrot.slane %v476, %v480
    %v499 = vunpack.c.l.b16 %v460
    %v500 = vunpack.c.l.b16 %v461
    %v501 = vunpack.c.l.b16 %v462
    %v502 = vunpack.c.l.b16 %v463
    %v503 = vunpack.c.l.b16 %v464
    %v504 = vunpack.c.l.b16 %v465
    %v505 = vunpack.c.l.b16 %v466
    %v506 = vunpack.c.l.b16 %v467
    %v507 = vunpack.c.l.b16 %v468
    %v508 = vunpack.c.l.b16 %v469
    %v509 = vunpack.c.l.b16 %v470
    %v510 = vunpack.c.l.b16 %v471
    %v511 = vunpack.c.l.b16 %v472
    %v512 = vunpack.c.l.b16 %v473
    %v513 = vunpack.c.l.b16 %v474
    %v514 = vunpack.c.l.b16 %v475
    %v515 = vpack.c.b16 %v500, %v499
    %v516 = vpack.c.b16 %v502, %v501
    %v517 = vpack.c.b16 %v504, %v503
    %v518 = vpack.c.b16 %v506, %v505
    %v519 = vpack.c.b16 %v508, %v507
    %v520 = vpack.c.b16 %v510, %v509
    %v521 = vpack.c.b16 %v512, %v511
    %v522 = vpack.c.b16 %v514, %v513
    %531 = vmatprep.subr.bf16.mxu0 0
    %532 = vmatpush1.bf16.msra.mxu0 %v522
    %533 = vmatprep.subr.bf16.mxu0 0
    %534 = vmatpush1.bf16.msra.mxu0 %v521
    %535 = vmatprep.subr.bf16.mxu0 0
    %536 = vmatpush1.bf16.msra.mxu0 %v520
    %537 = vmatprep.subr.bf16.mxu0 0
    %538 = vmatpush1.bf16.msra.mxu0 %v519
    %539 = vmatprep.subr.bf16.mxu0 0
    %540 = vmatpush1.bf16.msra.mxu0 %v518
    %541 = vmatprep.subr.bf16.mxu0 0
    %542 = vmatpush1.bf16.msra.mxu0 %v517
    %543 = vmatprep.subr.bf16.mxu0 0
    %544 = vmatpush1.bf16.msra.mxu0 %v516
    %545 = vmatprep.subr.bf16.mxu0 0
    %546 = vmatpush1.bf16.msra.mxu0 %v515
    %547 = vmatprep.subr.bf16.mxu0 0
    %548 = vmatpush2.bf16.msra.mxu0 0
    %549 = vmatprep.subr.bf16.mxu0 0
    %550 = vmatpush2.bf16.msra.mxu0 0
    %551 = vmatprep.subr.bf16.mxu0 0
    %552 = vmatpush2.bf16.msra.mxu0 0
    %553 = vmatprep.subr.bf16.mxu0 0
    %554 = vmatpush2.bf16.msra.mxu0 0
    %555 = vmatprep.subr.bf16.mxu0 0
    %556 = vmatpush2.bf16.msra.mxu0 0
    %557 = vmatprep.subr.bf16.mxu0 0
    %558 = vmatpush2.bf16.msra.mxu0 0
    %559 = vmatprep.subr.bf16.mxu0 0
    %560 = vmatpush2.bf16.msra.mxu0 0
    %561 = vmatprep.subr.bf16.mxu0 0
    %562 = vmatpush2.bf16.msra.mxu0 0
    %563 = vmatprep.mubr.bf16.mxu0 0
    %564 = vmatmul.mubr.bf16.gmra.mxu0 %v459
    %v565 = vpop.f32.mrf.mxu0
    %v566 = vadd.f32 %v481, %v565
    %v567 = vpop.f32.mrf.mxu0
    %v568 = vpop.f32.mrf.mxu0
    %v569 = vpop.f32.mrf.mxu0
    %570 = vdwg.mxu0
    %v571 = vmax.f32 %v566, 0.0
    %v572 = vpack.c.bf16 %v571, %v571
    %s573 = scalar_lea.vmem [#allocation7], 64
    %v574 = vld [vmem:[%s573] sm:$0xf]
    %v575 = vld [vmem:[%s573 + $0x4] sm:$0xf]
    %v576 = vld [vmem:[%s573 + $0x8] sm:$0xf]
    %v577 = vld [vmem:[%s573 + $0xc] sm:$0xf]
    %v578 = vld [vmem:[%s573 + $0x10] sm:$0xf]
    %v579 = vld [vmem:[%s573 + $0x14] sm:$0xf]
    %v580 = vld [vmem:[%s573 + $0x18] sm:$0xf]
    %v581 = vld [vmem:[%s573 + $0x1c] sm:$0xf]
    %v582 = vld [vmem:[%s573 + $0x20] sm:$0xf]
    %v583 = vld [vmem:[%s573 + $0x24] sm:$0xf]
    %v584 = vld [vmem:[%s573 + $0x28] sm:$0xf]
    %v585 = vld [vmem:[%s573 + $0x2c] sm:$0xf]
    %v586 = vld [vmem:[%s573 + $0x30] sm:$0xf]
    %v587 = vld [vmem:[%s573 + $0x34] sm:$0xf]
    %v588 = vld [vmem:[%s573 + $0x38] sm:$0xf]
    %v589 = vld [vmem:[%s573 + $0x3c] sm:$0xf]
    %s590 = scalar_lea.vmem [#allocation8], 1
    %v591 = vld [vmem:[%s590] sm:$0x1]
    %v593 = vlaneseq
    %v594 = vshrl.u32 %v593, 7
    %v595 = vsub.s32 0, %v594
    %v596 = vrot.slane %v591, %v595
    %v614 = vunpack.c.l.b16 %v574
    %v615 = vunpack.c.l.b16 %v575
    %v616 = vunpack.c.l.b16 %v576
    %v617 = vunpack.c.l.b16 %v577
    %v618 = vunpack.c.l.b16 %v578
    %v619 = vunpack.c.l.b16 %v579
    %v620 = vunpack.c.l.b16 %v580
    %v621 = vunpack.c.l.b16 %v581
    %v622 = vunpack.c.l.b16 %v582
    %v623 = vunpack.c.l.b16 %v583
    %v624 = vunpack.c.l.b16 %v584
    %v625 = vunpack.c.l.b16 %v585
    %v626 = vunpack.c.l.b16 %v586
    %v627 = vunpack.c.l.b16 %v587
    %v628 = vunpack.c.l.b16 %v588
    %v629 = vunpack.c.l.b16 %v589
    %v630 = vpack.c.b16 %v615, %v614
    %v631 = vpack.c.b16 %v617, %v616
    %v632 = vpack.c.b16 %v619, %v618
    %v633 = vpack.c.b16 %v621, %v620
    %v634 = vpack.c.b16 %v623, %v622
    %v635 = vpack.c.b16 %v625, %v624
    %v636 = vpack.c.b16 %v627, %v626
    %v637 = vpack.c.b16 %v629, %v628
    %646 = vmatprep.subr.bf16.mxu0 0
    %647 = vmatpush1.bf16.msra.mxu0 %v637
    %648 = vmatprep.subr.bf16.mxu0 0
    %649 = vmatpush1.bf16.msra.mxu0 %v636
    %650 = vmatprep.subr.bf16.mxu0 0
    %651 = vmatpush1.bf16.msra.mxu0 %v635
    %652 = vmatprep.subr.bf16.mxu0 0
    %653 = vmatpush1.bf16.msra.mxu0 %v634
    %654 = vmatprep.subr.bf16.mxu0 0
    %655 = vmatpush1.bf16.msra.mxu0 %v633
    %656 = vmatprep.subr.bf16.mxu0 0
    %657 = vmatpush1.bf16.msra.mxu0 %v632
    %658 = vmatprep.subr.bf16.mxu0 0
    %659 = vmatpush1.bf16.msra.mxu0 %v631
    %660 = vmatprep.subr.bf16.mxu0 0
    %661 = vmatpush1.bf16.msra.mxu0 %v630
    %662 = vmatprep.subr.bf16.mxu0 0
    %663 = vmatpush2.bf16.msra.mxu0 0
    %664 = vmatprep.subr.bf16.mxu0 0
    %665 = vmatpush2.bf16.msra.mxu0 0
    %666 = vmatprep.subr.bf16.mxu0 0
    %667 = vmatpush2.bf16.msra.mxu0 0
    %668 = vmatprep.subr.bf16.mxu0 0
    %669 = vmatpush2.bf16.msra.mxu0 0
    %670 = vmatprep.subr.bf16.mxu0 0
    %671 = vmatpush2.bf16.msra.mxu0 0
    %672 = vmatprep.subr.bf16.mxu0 0
    %673 = vmatpush2.bf16.msra.mxu0 0
    %674 = vmatprep.subr.bf16.mxu0 0
    %675 = vmatpush2.bf16.msra.mxu0 0
    %676 = vmatprep.subr.bf16.mxu0 0
    %677 = vmatpush2.bf16.msra.mxu0 0
    %678 = vmatprep.mubr.bf16.mxu0 0
    %679 = vmatmul.mubr.bf16.gmra.mxu0 %v572
    %v680 = vpop.f32.mrf.mxu0
    %v681 = vadd.f32 %v596, %v680
    %v682 = vpop.f32.mrf.mxu0
    %v683 = vpop.f32.mrf.mxu0
    %v684 = vpop.f32.mrf.mxu0
    %685 = vdwg.mxu0
    %v686 = vmax.f32 %v681, 0.0
    %v687 = vpack.c.bf16 %v686, %v686
    %s688 = scalar_lea.vmem [#allocation7], 128
    %v689 = vld [vmem:[%s688] sm:$0xf]
    %v690 = vld [vmem:[%s688 + $0x4] sm:$0xf]
    %v691 = vld [vmem:[%s688 + $0x8] sm:$0xf]
    %v692 = vld [vmem:[%s688 + $0xc] sm:$0xf]
    %v693 = vld [vmem:[%s688 + $0x10] sm:$0xf]
    %v694 = vld [vmem:[%s688 + $0x14] sm:$0xf]
    %v695 = vld [vmem:[%s688 + $0x18] sm:$0xf]
    %v696 = vld [vmem:[%s688 + $0x1c] sm:$0xf]
    %v697 = vld [vmem:[%s688 + $0x20] sm:$0xf]
    %v698 = vld [vmem:[%s688 + $0x24] sm:$0xf]
    %v699 = vld [vmem:[%s688 + $0x28] sm:$0xf]
    %v700 = vld [vmem:[%s688 + $0x2c] sm:$0xf]
    %v701 = vld [vmem:[%s688 + $0x30] sm:$0xf]
    %v702 = vld [vmem:[%s688 + $0x34] sm:$0xf]
    %v703 = vld [vmem:[%s688 + $0x38] sm:$0xf]
    %v704 = vld [vmem:[%s688 + $0x3c] sm:$0xf]
    %s705 = scalar_lea.vmem [#allocation8], 2
    %v706 = vld [vmem:[%s705] sm:$0x1]
    %v708 = vlaneseq
    %v709 = vshrl.u32 %v708, 7
    %v710 = vsub.s32 0, %v709
    %v711 = vrot.slane %v706, %v710
    %v729 = vunpack.c.l.b16 %v689
    %v730 = vunpack.c.l.b16 %v690
    %v731 = vunpack.c.l.b16 %v691
    %v732 = vunpack.c.l.b16 %v692
    %v733 = vunpack.c.l.b16 %v693
    %v734 = vunpack.c.l.b16 %v694
    %v735 = vunpack.c.l.b16 %v695
    %v736 = vunpack.c.l.b16 %v696
    %v737 = vunpack.c.l.b16 %v697
    %v738 = vunpack.c.l.b16 %v698
    %v739 = vunpack.c.l.b16 %v699
    %v740 = vunpack.c.l.b16 %v700
    %v741 = vunpack.c.l.b16 %v701
    %v742 = vunpack.c.l.b16 %v702
    %v743 = vunpack.c.l.b16 %v703
    %v744 = vunpack.c.l.b16 %v704
    %v745 = vpack.c.b16 %v730, %v729
    %v746 = vpack.c.b16 %v732, %v731
    %v747 = vpack.c.b16 %v734, %v733
    %v748 = vpack.c.b16 %v736, %v735
    %v749 = vpack.c.b16 %v738, %v737
    %v750 = vpack.c.b16 %v740, %v739
    %v751 = vpack.c.b16 %v742, %v741
    %v752 = vpack.c.b16 %v744, %v743
    %761 = vmatprep.subr.bf16.mxu0 0
    %762 = vmatpush1.bf16.msra.mxu0 %v752
    %763 = vmatprep.subr.bf16.mxu0 0
    %764 = vmatpush1.bf16.msra.mxu0 %v751
    %765 = vmatprep.subr.bf16.mxu0 0
    %766 = vmatpush1.bf16.msra.mxu0 %v750
    %767 = vmatprep.subr.bf16.mxu0 0
    %768 = vmatpush1.bf16.msra.mxu0 %v749
    %769 = vmatprep.subr.bf16.mxu0 0
    %770 = vmatpush1.bf16.msra.mxu0 %v748
    %771 = vmatprep.subr.bf16.mxu0 0
    %772 = vmatpush1.bf16.msra.mxu0 %v747
    %773 = vmatprep.subr.bf16.mxu0 0
    %774 = vmatpush1.bf16.msra.mxu0 %v746
    %775 = vmatprep.subr.bf16.mxu0 0
    %776 = vmatpush1.bf16.msra.mxu0 %v745
    %777 = vmatprep.subr.bf16.mxu0 0
    %778 = vmatpush2.bf16.msra.mxu0 0
    %779 = vmatprep.subr.bf16.mxu0 0
    %780 = vmatpush2.bf16.msra.mxu0 0
    %781 = vmatprep.subr.bf16.mxu0 0
    %782 = vmatpush2.bf16.msra.mxu0 0
    %783 = vmatprep.subr.bf16.mxu0 0
    %784 = vmatpush2.bf16.msra.mxu0 0
    %785 = vmatprep.subr.bf16.mxu0 0
    %786 = vmatpush2.bf16.msra.mxu0 0
    %787 = vmatprep.subr.bf16.mxu0 0
    %788 = vmatpush2.bf16.msra.mxu0 0
    %789 = vmatprep.subr.bf16.mxu0 0
    %790 = vmatpush2.bf16.msra.mxu0 0
    %791 = vmatprep.subr.bf16.mxu0 0
    %792 = vmatpush2.bf16.msra.mxu0 0
    %793 = vmatprep.mubr.bf16.mxu0 0
    %794 = vmatmul.mubr.bf16.gmra.mxu0 %v687
    %v795 = vpop.f32.mrf.mxu0
    %v796 = vadd.f32 %v711, %v795
    %v797 = vpop.f32.mrf.mxu0
    %v798 = vpop.f32.mrf.mxu0
    %v799 = vpop.f32.mrf.mxu0
    %800 = vdwg.mxu0
    %v801 = vmax.f32 %v796, 0.0
    %v802 = vpack.c.bf16 %v801, %v801
    %s803 = scalar_lea.vmem [#allocation7], 192
    %v804 = vld [vmem:[%s803] sm:$0xf]
    %v805 = vld [vmem:[%s803 + $0x4] sm:$0xf]
    %v806 = vld [vmem:[%s803 + $0x8] sm:$0xf]
    %v807 = vld [vmem:[%s803 + $0xc] sm:$0xf]
    %v808 = vld [vmem:[%s803 + $0x10] sm:$0xf]
    %v809 = vld [vmem:[%s803 + $0x14] sm:$0xf]
    %v810 = vld [vmem:[%s803 + $0x18] sm:$0xf]
    %v811 = vld [vmem:[%s803 + $0x1c] sm:$0xf]
    %v812 = vld [vmem:[%s803 + $0x20] sm:$0xf]
    %v813 = vld [vmem:[%s803 + $0x24] sm:$0xf]
    %v814 = vld [vmem:[%s803 + $0x28] sm:$0xf]
    %v815 = vld [vmem:[%s803 + $0x2c] sm:$0xf]
    %v816 = vld [vmem:[%s803 + $0x30] sm:$0xf]
    %v817 = vld [vmem:[%s803 + $0x34] sm:$0xf]
    %v818 = vld [vmem:[%s803 + $0x38] sm:$0xf]
    %v819 = vld [vmem:[%s803 + $0x3c] sm:$0xf]
    %s820 = scalar_lea.vmem [#allocation8], 3
    %v821 = vld [vmem:[%s820] sm:$0x1]
    %v823 = vlaneseq
    %v824 = vshrl.u32 %v823, 7
    %v825 = vsub.s32 0, %v824
    %v826 = vrot.slane %v821, %v825
    %v844 = vunpack.c.l.b16 %v804
    %v845 = vunpack.c.l.b16 %v805
    %v846 = vunpack.c.l.b16 %v806
    %v847 = vunpack.c.l.b16 %v807
    %v848 = vunpack.c.l.b16 %v808
    %v849 = vunpack.c.l.b16 %v809
    %v850 = vunpack.c.l.b16 %v810
    %v851 = vunpack.c.l.b16 %v811
    %v852 = vunpack.c.l.b16 %v812
    %v853 = vunpack.c.l.b16 %v813
    %v854 = vunpack.c.l.b16 %v814
    %v855 = vunpack.c.l.b16 %v815
    %v856 = vunpack.c.l.b16 %v816
    %v857 = vunpack.c.l.b16 %v817
    %v858 = vunpack.c.l.b16 %v818
    %v859 = vunpack.c.l.b16 %v819
    %v860 = vpack.c.b16 %v845, %v844
    %v861 = vpack.c.b16 %v847, %v846
    %v862 = vpack.c.b16 %v849, %v848
    %v863 = vpack.c.b16 %v851, %v850
    %v864 = vpack.c.b16 %v853, %v852
    %v865 = vpack.c.b16 %v855, %v854
    %v866 = vpack.c.b16 %v857, %v856
    %v867 = vpack.c.b16 %v859, %v858
    %876 = vmatprep.subr.bf16.mxu0 0
    %877 = vmatpush1.bf16.msra.mxu0 %v867
    %878 = vmatprep.subr.bf16.mxu0 0
    %879 = vmatpush1.bf16.msra.mxu0 %v866
    %880 = vmatprep.subr.bf16.mxu0 0
    %881 = vmatpush1.bf16.msra.mxu0 %v865
    %882 = vmatprep.subr.bf16.mxu0 0
    %883 = vmatpush1.bf16.msra.mxu0 %v864
    %884 = vmatprep.subr.bf16.mxu0 0
    %885 = vmatpush1.bf16.msra.mxu0 %v863
    %886 = vmatprep.subr.bf16.mxu0 0
    %887 = vmatpush1.bf16.msra.mxu0 %v862
    %888 = vmatprep.subr.bf16.mxu0 0
    %889 = vmatpush1.bf16.msra.mxu0 %v861
    %890 = vmatprep.subr.bf16.mxu0 0
    %891 = vmatpush1.bf16.msra.mxu0 %v860
    %892 = vmatprep.subr.bf16.mxu0 0
    %893 = vmatpush2.bf16.msra.mxu0 0
    %894 = vmatprep.subr.bf16.mxu0 0
    %895 = vmatpush2.bf16.msra.mxu0 0
    %896 = vmatprep.subr.bf16.mxu0 0
    %897 = vmatpush2.bf16.msra.mxu0 0
    %898 = vmatprep.subr.bf16.mxu0 0
    %899 = vmatpush2.bf16.msra.mxu0 0
    %900 = vmatprep.subr.bf16.mxu0 0
    %901 = vmatpush2.bf16.msra.mxu0 0
    %902 = vmatprep.subr.bf16.mxu0 0
    %903 = vmatpush2.bf16.msra.mxu0 0
    %904 = vmatprep.subr.bf16.mxu0 0
    %905 = vmatpush2.bf16.msra.mxu0 0
    %906 = vmatprep.subr.bf16.mxu0 0
    %907 = vmatpush2.bf16.msra.mxu0 0
    %908 = vmatprep.mubr.bf16.mxu0 0
    %909 = vmatmul.mubr.bf16.gmra.mxu0 %v802
    %v910 = vpop.f32.mrf.mxu0
    %v911 = vadd.f32 %v826, %v910
    %v912 = vpop.f32.mrf.mxu0
    %v913 = vpop.f32.mrf.mxu0
    %v914 = vpop.f32.mrf.mxu0
    %915 = vdwg.mxu0
    %v916 = vmax.f32 %v911, 0.0
    %v917 = vpack.c.bf16 %v916, %v916
    %s918 = scalar_lea.vmem [#allocation7], 256
    %v919 = vld [vmem:[%s918] sm:$0xf]
    %v920 = vld [vmem:[%s918 + $0x4] sm:$0xf]
    %v921 = vld [vmem:[%s918 + $0x8] sm:$0xf]
    %v922 = vld [vmem:[%s918 + $0xc] sm:$0xf]
    %v923 = vld [vmem:[%s918 + $0x10] sm:$0xf]
    %v924 = vld [vmem:[%s918 + $0x14] sm:$0xf]
    %v925 = vld [vmem:[%s918 + $0x18] sm:$0xf]
    %v926 = vld [vmem:[%s918 + $0x1c] sm:$0xf]
    %v927 = vld [vmem:[%s918 + $0x20] sm:$0xf]
    %v928 = vld [vmem:[%s918 + $0x24] sm:$0xf]
    %v929 = vld [vmem:[%s918 + $0x28] sm:$0xf]
    %v930 = vld [vmem:[%s918 + $0x2c] sm:$0xf]
    %v931 = vld [vmem:[%s918 + $0x30] sm:$0xf]
    %v932 = vld [vmem:[%s918 + $0x34] sm:$0xf]
    %v933 = vld [vmem:[%s918 + $0x38] sm:$0xf]
    %v934 = vld [vmem:[%s918 + $0x3c] sm:$0xf]
    %s935 = scalar_lea.vmem [#allocation8], 4
    %v936 = vld [vmem:[%s935] sm:$0x1]
    %v938 = vlaneseq
    %v939 = vshrl.u32 %v938, 7
    %v940 = vsub.s32 0, %v939
    %v941 = vrot.slane %v936, %v940
    %v959 = vunpack.c.l.b16 %v919
    %v960 = vunpack.c.l.b16 %v920
    %v961 = vunpack.c.l.b16 %v921
    %v962 = vunpack.c.l.b16 %v922
    %v963 = vunpack.c.l.b16 %v923
    %v964 = vunpack.c.l.b16 %v924
    %v965 = vunpack.c.l.b16 %v925
    %v966 = vunpack.c.l.b16 %v926
    %v967 = vunpack.c.l.b16 %v927
    %v968 = vunpack.c.l.b16 %v928
    %v969 = vunpack.c.l.b16 %v929
    %v970 = vunpack.c.l.b16 %v930
    %v971 = vunpack.c.l.b16 %v931
    %v972 = vunpack.c.l.b16 %v932
    %v973 = vunpack.c.l.b16 %v933
    %v974 = vunpack.c.l.b16 %v934
    %v975 = vpack.c.b16 %v960, %v959
    %v976 = vpack.c.b16 %v962, %v961
    %v977 = vpack.c.b16 %v964, %v963
    %v978 = vpack.c.b16 %v966, %v965
    %v979 = vpack.c.b16 %v968, %v967
    %v980 = vpack.c.b16 %v970, %v969
    %v981 = vpack.c.b16 %v972, %v971
    %v982 = vpack.c.b16 %v974, %v973
    %991 = vmatprep.subr.bf16.mxu0 0
    %992 = vmatpush1.bf16.msra.mxu0 %v982
    %993 = vmatprep.subr.bf16.mxu0 0
    %994 = vmatpush1.bf16.msra.mxu0 %v981
    %995 = vmatprep.subr.bf16.mxu0 0
    %996 = vmatpush1.bf16.msra.mxu0 %v980
    %997 = vmatprep.subr.bf16.mxu0 0
    %998 = vmatpush1.bf16.msra.mxu0 %v979
    %999 = vmatprep.subr.bf16.mxu0 0
    %1000 = vmatpush1.bf16.msra.mxu0 %v978
    %1001 = vmatprep.subr.bf16.mxu0 0
    %1002 = vmatpush1.bf16.msra.mxu0 %v977
    %1003 = vmatprep.subr.bf16.mxu0 0
    %1004 = vmatpush1.bf16.msra.mxu0 %v976
    %1005 = vmatprep.subr.bf16.mxu0 0
    %1006 = vmatpush1.bf16.msra.mxu0 %v975
    %1007 = vmatprep.subr.bf16.mxu0 0
    %1008 = vmatpush2.bf16.msra.mxu0 0
    %1009 = vmatprep.subr.bf16.mxu0 0
    %1010 = vmatpush2.bf16.msra.mxu0 0
    %1011 = vmatprep.subr.bf16.mxu0 0
    %1012 = vmatpush2.bf16.msra.mxu0 0
    %1013 = vmatprep.subr.bf16.mxu0 0
    %1014 = vmatpush2.bf16.msra.mxu0 0
    %1015 = vmatprep.subr.bf16.mxu0 0
    %1016 = vmatpush2.bf16.msra.mxu0 0
    %1017 = vmatprep.subr.bf16.mxu0 0
    %1018 = vmatpush2.bf16.msra.mxu0 0
    %1019 = vmatprep.subr.bf16.mxu0 0
    %1020 = vmatpush2.bf16.msra.mxu0 0
    %1021 = vmatprep.subr.bf16.mxu0 0
    %1022 = vmatpush2.bf16.msra.mxu0 0
    %1023 = vmatprep.mubr.bf16.mxu0 0
    %1024 = vmatmul.mubr.bf16.gmra.mxu0 %v917
    %v1025 = vpop.f32.mrf.mxu0
    %v1026 = vadd.f32 %v941, %v1025
    %v1027 = vpop.f32.mrf.mxu0
    %v1028 = vpop.f32.mrf.mxu0
    %v1029 = vpop.f32.mrf.mxu0
    %1030 = vdwg.mxu0
    %v1031 = vmax.f32 %v1026, 0.0
    %v1032 = vpack.c.bf16 %v1031, %v1031
    %s1033 = scalar_lea.vmem [#allocation7], 320
    %v1034 = vld [vmem:[%s1033] sm:$0xf]
    %v1035 = vld [vmem:[%s1033 + $0x4] sm:$0xf]
    %v1036 = vld [vmem:[%s1033 + $0x8] sm:$0xf]
    %v1037 = vld [vmem:[%s1033 + $0xc] sm:$0xf]
    %v1038 = vld [vmem:[%s1033 + $0x10] sm:$0xf]
    %v1039 = vld [vmem:[%s1033 + $0x14] sm:$0xf]
    %v1040 = vld [vmem:[%s1033 + $0x18] sm:$0xf]
    %v1041 = vld [vmem:[%s1033 + $0x1c] sm:$0xf]
    %v1042 = vld [vmem:[%s1033 + $0x20] sm:$0xf]
    %v1043 = vld [vmem:[%s1033 + $0x24] sm:$0xf]
    %v1044 = vld [vmem:[%s1033 + $0x28] sm:$0xf]
    %v1045 = vld [vmem:[%s1033 + $0x2c] sm:$0xf]
    %v1046 = vld [vmem:[%s1033 + $0x30] sm:$0xf]
    %v1047 = vld [vmem:[%s1033 + $0x34] sm:$0xf]
    %v1048 = vld [vmem:[%s1033 + $0x38] sm:$0xf]
    %v1049 = vld [vmem:[%s1033 + $0x3c] sm:$0xf]
    %s1050 = scalar_lea.vmem [#allocation8], 5
    %v1051 = vld [vmem:[%s1050] sm:$0x1]
    %v1053 = vlaneseq
    %v1054 = vshrl.u32 %v1053, 7
    %v1055 = vsub.s32 0, %v1054
    %v1056 = vrot.slane %v1051, %v1055
    %v1074 = vunpack.c.l.b16 %v1034
    %v1075 = vunpack.c.l.b16 %v1035
    %v1076 = vunpack.c.l.b16 %v1036
    %v1077 = vunpack.c.l.b16 %v1037
    %v1078 = vunpack.c.l.b16 %v1038
    %v1079 = vunpack.c.l.b16 %v1039
    %v1080 = vunpack.c.l.b16 %v1040
    %v1081 = vunpack.c.l.b16 %v1041
    %v1082 = vunpack.c.l.b16 %v1042
    %v1083 = vunpack.c.l.b16 %v1043
    %v1084 = vunpack.c.l.b16 %v1044
    %v1085 = vunpack.c.l.b16 %v1045
    %v1086 = vunpack.c.l.b16 %v1046
    %v1087 = vunpack.c.l.b16 %v1047
    %v1088 = vunpack.c.l.b16 %v1048
    %v1089 = vunpack.c.l.b16 %v1049
    %v1090 = vpack.c.b16 %v1075, %v1074
    %v1091 = vpack.c.b16 %v1077, %v1076
    %v1092 = vpack.c.b16 %v1079, %v1078
    %v1093 = vpack.c.b16 %v1081, %v1080
    %v1094 = vpack.c.b16 %v1083, %v1082
    %v1095 = vpack.c.b16 %v1085, %v1084
    %v1096 = vpack.c.b16 %v1087, %v1086
    %v1097 = vpack.c.b16 %v1089, %v1088
    %1106 = vmatprep.subr.bf16.mxu0 0
    %1107 = vmatpush1.bf16.msra.mxu0 %v1097
    %1108 = vmatprep.subr.bf16.mxu0 0
    %1109 = vmatpush1.bf16.msra.mxu0 %v1096
    %1110 = vmatprep.subr.bf16.mxu0 0
    %1111 = vmatpush1.bf16.msra.mxu0 %v1095
    %1112 = vmatprep.subr.bf16.mxu0 0
    %1113 = vmatpush1.bf16.msra.mxu0 %v1094
    %1114 = vmatprep.subr.bf16.mxu0 0
    %1115 = vmatpush1.bf16.msra.mxu0 %v1093
    %1116 = vmatprep.subr.bf16.mxu0 0
    %1117 = vmatpush1.bf16.msra.mxu0 %v1092
    %1118 = vmatprep.subr.bf16.mxu0 0
    %1119 = vmatpush1.bf16.msra.mxu0 %v1091
    %1120 = vmatprep.subr.bf16.mxu0 0
    %1121 = vmatpush1.bf16.msra.mxu0 %v1090
    %1122 = vmatprep.subr.bf16.mxu0 0
    %1123 = vmatpush2.bf16.msra.mxu0 0
    %1124 = vmatprep.subr.bf16.mxu0 0
    %1125 = vmatpush2.bf16.msra.mxu0 0
    %1126 = vmatprep.subr.bf16.mxu0 0
    %1127 = vmatpush2.bf16.msra.mxu0 0
    %1128 = vmatprep.subr.bf16.mxu0 0
    %1129 = vmatpush2.bf16.msra.mxu0 0
    %1130 = vmatprep.subr.bf16.mxu0 0
    %1131 = vmatpush2.bf16.msra.mxu0 0
    %1132 = vmatprep.subr.bf16.mxu0 0
    %1133 = vmatpush2.bf16.msra.mxu0 0
    %1134 = vmatprep.subr.bf16.mxu0 0
    %1135 = vmatpush2.bf16.msra.mxu0 0
    %1136 = vmatprep.subr.bf16.mxu0 0
    %1137 = vmatpush2.bf16.msra.mxu0 0
    %1138 = vmatprep.mubr.bf16.mxu0 0
    %1139 = vmatmul.mubr.bf16.gmra.mxu0 %v1032
    %v1140 = vpop.f32.mrf.mxu0
    %v1141 = vadd.f32 %v1056, %v1140
    %v1142 = vpop.f32.mrf.mxu0
    %v1143 = vpop.f32.mrf.mxu0
    %v1144 = vpop.f32.mrf.mxu0
    %1145 = vdwg.mxu0
    %v1146 = vmax.f32 %v1141, 0.0
    %v1147 = vpack.c.bf16 %v1146, %v1146
    %s1148 = scalar_lea.vmem [#allocation7], 384
    %v1149 = vld [vmem:[%s1148] sm:$0xf]
    %v1150 = vld [vmem:[%s1148 + $0x4] sm:$0xf]
    %v1151 = vld [vmem:[%s1148 + $0x8] sm:$0xf]
    %v1152 = vld [vmem:[%s1148 + $0xc] sm:$0xf]
    %v1153 = vld [vmem:[%s1148 + $0x10] sm:$0xf]
    %v1154 = vld [vmem:[%s1148 + $0x14] sm:$0xf]
    %v1155 = vld [vmem:[%s1148 + $0x18] sm:$0xf]
    %v1156 = vld [vmem:[%s1148 + $0x1c] sm:$0xf]
    %v1157 = vld [vmem:[%s1148 + $0x20] sm:$0xf]
    %v1158 = vld [vmem:[%s1148 + $0x24] sm:$0xf]
    %v1159 = vld [vmem:[%s1148 + $0x28] sm:$0xf]
    %v1160 = vld [vmem:[%s1148 + $0x2c] sm:$0xf]
    %v1161 = vld [vmem:[%s1148 + $0x30] sm:$0xf]
    %v1162 = vld [vmem:[%s1148 + $0x34] sm:$0xf]
    %v1163 = vld [vmem:[%s1148 + $0x38] sm:$0xf]
    %v1164 = vld [vmem:[%s1148 + $0x3c] sm:$0xf]
    %s1165 = scalar_lea.vmem [#allocation8], 6
    %v1166 = vld [vmem:[%s1165] sm:$0x1]
    %v1168 = vlaneseq
    %v1169 = vshrl.u32 %v1168, 7
    %v1170 = vsub.s32 0, %v1169
    %v1171 = vrot.slane %v1166, %v1170
    %v1189 = vunpack.c.l.b16 %v1149
    %v1190 = vunpack.c.l.b16 %v1150
    %v1191 = vunpack.c.l.b16 %v1151
    %v1192 = vunpack.c.l.b16 %v1152
    %v1193 = vunpack.c.l.b16 %v1153
    %v1194 = vunpack.c.l.b16 %v1154
    %v1195 = vunpack.c.l.b16 %v1155
    %v1196 = vunpack.c.l.b16 %v1156
    %v1197 = vunpack.c.l.b16 %v1157
    %v1198 = vunpack.c.l.b16 %v1158
    %v1199 = vunpack.c.l.b16 %v1159
    %v1200 = vunpack.c.l.b16 %v1160
    %v1201 = vunpack.c.l.b16 %v1161
    %v1202 = vunpack.c.l.b16 %v1162
    %v1203 = vunpack.c.l.b16 %v1163
    %v1204 = vunpack.c.l.b16 %v1164
    %v1205 = vpack.c.b16 %v1190, %v1189
    %v1206 = vpack.c.b16 %v1192, %v1191
    %v1207 = vpack.c.b16 %v1194, %v1193
    %v1208 = vpack.c.b16 %v1196, %v1195
    %v1209 = vpack.c.b16 %v1198, %v1197
    %v1210 = vpack.c.b16 %v1200, %v1199
    %v1211 = vpack.c.b16 %v1202, %v1201
    %v1212 = vpack.c.b16 %v1204, %v1203
    %1221 = vmatprep.subr.bf16.mxu0 0
    %1222 = vmatpush1.bf16.msra.mxu0 %v1212
    %1223 = vmatprep.subr.bf16.mxu0 0
    %1224 = vmatpush1.bf16.msra.mxu0 %v1211
    %1225 = vmatprep.subr.bf16.mxu0 0
    %1226 = vmatpush1.bf16.msra.mxu0 %v1210
    %1227 = vmatprep.subr.bf16.mxu0 0
    %1228 = vmatpush1.bf16.msra.mxu0 %v1209
    %1229 = vmatprep.subr.bf16.mxu0 0
    %1230 = vmatpush1.bf16.msra.mxu0 %v1208
    %1231 = vmatprep.subr.bf16.mxu0 0
    %1232 = vmatpush1.bf16.msra.mxu0 %v1207
    %1233 = vmatprep.subr.bf16.mxu0 0
    %1234 = vmatpush1.bf16.msra.mxu0 %v1206
    %1235 = vmatprep.subr.bf16.mxu0 0
    %1236 = vmatpush1.bf16.msra.mxu0 %v1205
    %1237 = vmatprep.subr.bf16.mxu0 0
    %1238 = vmatpush2.bf16.msra.mxu0 0
    %1239 = vmatprep.subr.bf16.mxu0 0
    %1240 = vmatpush2.bf16.msra.mxu0 0
    %1241 = vmatprep.subr.bf16.mxu0 0
    %1242 = vmatpush2.bf16.msra.mxu0 0
    %1243 = vmatprep.subr.bf16.mxu0 0
    %1244 = vmatpush2.bf16.msra.mxu0 0
    %1245 = vmatprep.subr.bf16.mxu0 0
    %1246 = vmatpush2.bf16.msra.mxu0 0
    %1247 = vmatprep.subr.bf16.mxu0 0
    %1248 = vmatpush2.bf16.msra.mxu0 0
    %1249 = vmatprep.subr.bf16.mxu0 0
    %1250 = vmatpush2.bf16.msra.mxu0 0
    %1251 = vmatprep.subr.bf16.mxu0 0
    %1252 = vmatpush2.bf16.msra.mxu0 0
    %1253 = vmatprep.mubr.bf16.mxu0 0
    %1254 = vmatmul.mubr.bf16.gmra.mxu0 %v1147
    %v1255 = vpop.f32.mrf.mxu0
    %v1256 = vadd.f32 %v1171, %v1255
    %v1257 = vpop.f32.mrf.mxu0
    %v1258 = vpop.f32.mrf.mxu0
    %v1259 = vpop.f32.mrf.mxu0
    %1260 = vdwg.mxu0
    %v1261 = vmax.f32 %v1256, 0.0
    %v1262 = vpack.c.bf16 %v1261, %v1261
    %s1263 = scalar_lea.vmem [#allocation7], 448
    %v1264 = vld [vmem:[%s1263] sm:$0xf]
    %v1265 = vld [vmem:[%s1263 + $0x4] sm:$0xf]
    %v1266 = vld [vmem:[%s1263 + $0x8] sm:$0xf]
    %v1267 = vld [vmem:[%s1263 + $0xc] sm:$0xf]
    %v1268 = vld [vmem:[%s1263 + $0x10] sm:$0xf]
    %v1269 = vld [vmem:[%s1263 + $0x14] sm:$0xf]
    %v1270 = vld [vmem:[%s1263 + $0x18] sm:$0xf]
    %v1271 = vld [vmem:[%s1263 + $0x1c] sm:$0xf]
    %v1272 = vld [vmem:[%s1263 + $0x20] sm:$0xf]
    %v1273 = vld [vmem:[%s1263 + $0x24] sm:$0xf]
    %v1274 = vld [vmem:[%s1263 + $0x28] sm:$0xf]
    %v1275 = vld [vmem:[%s1263 + $0x2c] sm:$0xf]
    %v1276 = vld [vmem:[%s1263 + $0x30] sm:$0xf]
    %v1277 = vld [vmem:[%s1263 + $0x34] sm:$0xf]
    %v1278 = vld [vmem:[%s1263 + $0x38] sm:$0xf]
    %v1279 = vld [vmem:[%s1263 + $0x3c] sm:$0xf]
    %s1280 = scalar_lea.vmem [#allocation8], 7
    %v1281 = vld [vmem:[%s1280] sm:$0x1]
    %v1283 = vlaneseq
    %v1284 = vshrl.u32 %v1283, 7
    %v1285 = vsub.s32 0, %v1284
    %v1286 = vrot.slane %v1281, %v1285
    %v1304 = vunpack.c.l.b16 %v1264
    %v1305 = vunpack.c.l.b16 %v1265
    %v1306 = vunpack.c.l.b16 %v1266
    %v1307 = vunpack.c.l.b16 %v1267
    %v1308 = vunpack.c.l.b16 %v1268
    %v1309 = vunpack.c.l.b16 %v1269
    %v1310 = vunpack.c.l.b16 %v1270
    %v1311 = vunpack.c.l.b16 %v1271
    %v1312 = vunpack.c.l.b16 %v1272
    %v1313 = vunpack.c.l.b16 %v1273
    %v1314 = vunpack.c.l.b16 %v1274
    %v1315 = vunpack.c.l.b16 %v1275
    %v1316 = vunpack.c.l.b16 %v1276
    %v1317 = vunpack.c.l.b16 %v1277
    %v1318 = vunpack.c.l.b16 %v1278
    %v1319 = vunpack.c.l.b16 %v1279
    %v1320 = vpack.c.b16 %v1305, %v1304
    %v1321 = vpack.c.b16 %v1307, %v1306
    %v1322 = vpack.c.b16 %v1309, %v1308
    %v1323 = vpack.c.b16 %v1311, %v1310
    %v1324 = vpack.c.b16 %v1313, %v1312
    %v1325 = vpack.c.b16 %v1315, %v1314
    %v1326 = vpack.c.b16 %v1317, %v1316
    %v1327 = vpack.c.b16 %v1319, %v1318
    %1336 = vmatprep.subr.bf16.mxu0 0
    %1337 = vmatpush1.bf16.msra.mxu0 %v1327
    %1338 = vmatprep.subr.bf16.mxu0 0
    %1339 = vmatpush1.bf16.msra.mxu0 %v1326
    %1340 = vmatprep.subr.bf16.mxu0 0
    %1341 = vmatpush1.bf16.msra.mxu0 %v1325
    %1342 = vmatprep.subr.bf16.mxu0 0
    %1343 = vmatpush1.bf16.msra.mxu0 %v1324
    %1344 = vmatprep.subr.bf16.mxu0 0
    %1345 = vmatpush1.bf16.msra.mxu0 %v1323
    %1346 = vmatprep.subr.bf16.mxu0 0
    %1347 = vmatpush1.bf16.msra.mxu0 %v1322
    %1348 = vmatprep.subr.bf16.mxu0 0
    %1349 = vmatpush1.bf16.msra.mxu0 %v1321
    %1350 = vmatprep.subr.bf16.mxu0 0
    %1351 = vmatpush1.bf16.msra.mxu0 %v1320
    %1352 = vmatprep.subr.bf16.mxu0 0
    %1353 = vmatpush2.bf16.msra.mxu0 0
    %1354 = vmatprep.subr.bf16.mxu0 0
    %1355 = vmatpush2.bf16.msra.mxu0 0
    %1356 = vmatprep.subr.bf16.mxu0 0
    %1357 = vmatpush2.bf16.msra.mxu0 0
    %1358 = vmatprep.subr.bf16.mxu0 0
    %1359 = vmatpush2.bf16.msra.mxu0 0
    %1360 = vmatprep.subr.bf16.mxu0 0
    %1361 = vmatpush2.bf16.msra.mxu0 0
    %1362 = vmatprep.subr.bf16.mxu0 0
    %1363 = vmatpush2.bf16.msra.mxu0 0
    %1364 = vmatprep.subr.bf16.mxu0 0
    %1365 = vmatpush2.bf16.msra.mxu0 0
    %1366 = vmatprep.subr.bf16.mxu0 0
    %1367 = vmatpush2.bf16.msra.mxu0 0
    %1368 = vmatprep.mubr.bf16.mxu0 0
    %1369 = vmatmul.mubr.bf16.gmra.mxu0 %v1262
    %v1370 = vpop.f32.mrf.mxu0
    %v1371 = vadd.f32 %v1286, %v1370
    %v1372 = vpop.f32.mrf.mxu0
    %v1373 = vpop.f32.mrf.mxu0
    %v1374 = vpop.f32.mrf.mxu0
    %1375 = vdwg.mxu0
    %v1376 = vmax.f32 %v1371, 0.0
    %v1377 = vpack.c.bf16 %v1376, %v1376
    %v1378 = vld [vmem:[#allocation10] sm:$0xff]
    %v1379 = vld [vmem:[#allocation10 + $0x8] sm:$0xff]
    %v1380 = vld [vmem:[#allocation10 + $0x10] sm:$0xff]
    %v1381 = vld [vmem:[#allocation10 + $0x18] sm:$0xff]
    %v1382 = vld [vmem:[#allocation10 + $0x20] sm:$0xff]
    %v1383 = vld [vmem:[#allocation10 + $0x28] sm:$0xff]
    %v1384 = vld [vmem:[#allocation10 + $0x30] sm:$0xff]
    %v1385 = vld [vmem:[#allocation10 + $0x38] sm:$0xff]
    %v1386 = vld [vmem:[#allocation10 + $0x40] sm:$0xff]
    %v1387 = vld [vmem:[#allocation10 + $0x48] sm:$0xff]
    %v1388 = vld [vmem:[#allocation10 + $0x50] sm:$0xff]
    %v1389 = vld [vmem:[#allocation10 + $0x58] sm:$0xff]
    %v1390 = vld [vmem:[#allocation10 + $0x60] sm:$0xff]
    %v1391 = vld [vmem:[#allocation10 + $0x68] sm:$0xff]
    %v1392 = vld [vmem:[#allocation10 + $0x70] sm:$0xff]
    %v1393 = vld [vmem:[#allocation10 + $0x78] sm:$0xff]
    %v1394 = vld [vmem:[#allocation10 + $0x80] sm:$0xff]
    %v1395 = vld [vmem:[#allocation10 + $0x88] sm:$0xff]
    %v1396 = vld [vmem:[#allocation10 + $0x90] sm:$0xff]
    %v1397 = vld [vmem:[#allocation10 + $0x98] sm:$0xff]
    %v1398 = vld [vmem:[#allocation10 + $0xa0] sm:$0xff]
    %v1399 = vld [vmem:[#allocation10 + $0xa8] sm:$0xff]
    %v1400 = vld [vmem:[#allocation10 + $0xb0] sm:$0xff]
    %v1401 = vld [vmem:[#allocation10 + $0xb8] sm:$0xff]
    %v1402 = vld [vmem:[#allocation10 + $0xc0] sm:$0xff]
    %v1403 = vld [vmem:[#allocation10 + $0xc8] sm:$0xff]
    %v1404 = vld [vmem:[#allocation10 + $0xd0] sm:$0xff]
    %v1405 = vld [vmem:[#allocation10 + $0xd8] sm:$0xff]
    %v1406 = vld [vmem:[#allocation10 + $0xe0] sm:$0xff]
    %v1407 = vld [vmem:[#allocation10 + $0xe8] sm:$0xff]
    %v1408 = vld [vmem:[#allocation10 + $0xf0] sm:$0xff]
    %v1409 = vld [vmem:[#allocation10 + $0xf8] sm:$0xff]
    %v1410 = vld [vmem:[%s6] sm:$0xf]
    %v1412 = vlaneseq
    %v1413 = vshrl.u32 %v1412, 7
    %v1414 = vsub.s32 0, %v1413
    %v1415 = vrot.slane %v1410, %v1414
    %v1416 = vlaneseq
    %v1417 = vshrl.u32 %v1416, 7
    %v1418 = vsub.s32 1, %v1417
    %v1419 = vrot.slane %v1410, %v1418
    %v1420 = vlaneseq
    %v1421 = vshrl.u32 %v1420, 7
    %v1422 = vsub.s32 2, %v1421
    %v1423 = vrot.slane %v1410, %v1422
    %v1424 = vlaneseq
    %v1425 = vshrl.u32 %v1424, 7
    %v1426 = vsub.s32 3, %v1425
    %v1427 = vrot.slane %v1410, %v1426
    %v1464 = vunpack.c.l.b16 %v1378
    %v1465 = vunpack.c.h.b16 %v1378
    %v1466 = vunpack.c.l.b16 %v1379
    %v1467 = vunpack.c.h.b16 %v1379
    %v1468 = vunpack.c.l.b16 %v1380
    %v1469 = vunpack.c.h.b16 %v1380
    %v1470 = vunpack.c.l.b16 %v1381
    %v1471 = vunpack.c.h.b16 %v1381
    %v1472 = vunpack.c.l.b16 %v1382
    %v1473 = vunpack.c.h.b16 %v1382
    %v1474 = vunpack.c.l.b16 %v1383
    %v1475 = vunpack.c.h.b16 %v1383
    %v1476 = vunpack.c.l.b16 %v1384
    %v1477 = vunpack.c.h.b16 %v1384
    %v1478 = vunpack.c.l.b16 %v1385
    %v1479 = vunpack.c.h.b16 %v1385
    %v1480 = vunpack.c.l.b16 %v1386
    %v1481 = vunpack.c.h.b16 %v1386
    %v1482 = vunpack.c.l.b16 %v1387
    %v1483 = vunpack.c.h.b16 %v1387
    %v1484 = vunpack.c.l.b16 %v1388
    %v1485 = vunpack.c.h.b16 %v1388
    %v1486 = vunpack.c.l.b16 %v1389
    %v1487 = vunpack.c.h.b16 %v1389
    %v1488 = vunpack.c.l.b16 %v1390
    %v1489 = vunpack.c.h.b16 %v1390
    %v1490 = vunpack.c.l.b16 %v1391
    %v1491 = vunpack.c.h.b16 %v1391
    %v1492 = vunpack.c.l.b16 %v1392
    %v1493 = vunpack.c.h.b16 %v1392
    %v1494 = vunpack.c.l.b16 %v1393
    %v1495 = vunpack.c.h.b16 %v1393
    %v1496 = vunpack.c.l.b16 %v1394
    %v1497 = vunpack.c.h.b16 %v1394
    %v1498 = vunpack.c.l.b16 %v1395
    %v1499 = vunpack.c.h.b16 %v1395
    %v1500 = vunpack.c.l.b16 %v1396
    %v1501 = vunpack.c.h.b16 %v1396
    %v1502 = vunpack.c.l.b16 %v1397
    %v1503 = vunpack.c.h.b16 %v1397
    %v1504 = vunpack.c.l.b16 %v1398
    %v1505 = vunpack.c.h.b16 %v1398
    %v1506 = vunpack.c.l.b16 %v1399
    %v1507 = vunpack.c.h.b16 %v1399
    %v1508 = vunpack.c.l.b16 %v1400
    %v1509 = vunpack.c.h.b16 %v1400
    %v1510 = vunpack.c.l.b16 %v1401
    %v1511 = vunpack.c.h.b16 %v1401
    %v1512 = vunpack.c.l.b16 %v1402
    %v1513 = vunpack.c.h.b16 %v1402
    %v1514 = vunpack.c.l.b16 %v1403
    %v1515 = vunpack.c.h.b16 %v1403
    %v1516 = vunpack.c.l.b16 %v1404
    %v1517 = vunpack.c.h.b16 %v1404
    %v1518 = vunpack.c.l.b16 %v1405
    %v1519 = vunpack.c.h.b16 %v1405
    %v1520 = vunpack.c.l.b16 %v1406
    %v1521 = vunpack.c.h.b16 %v1406
    %v1522 = vunpack.c.l.b16 %v1407
    %v1523 = vunpack.c.h.b16 %v1407
    %v1524 = vunpack.c.l.b16 %v1408
    %v1525 = vunpack.c.h.b16 %v1408
    %v1526 = vunpack.c.l.b16 %v1409
    %v1527 = vunpack.c.h.b16 %v1409
    %v1528 = vpack.c.b16 %v1468, %v1464
    %v1529 = vpack.c.b16 %v1469, %v1465
    %v1530 = vpack.c.b16 %v1470, %v1466
    %v1531 = vpack.c.b16 %v1471, %v1467
    %v1532 = vpack.c.b16 %v1476, %v1472
    %v1533 = vpack.c.b16 %v1477, %v1473
    %v1534 = vpack.c.b16 %v1478, %v1474
    %v1535 = vpack.c.b16 %v1479, %v1475
    %v1536 = vpack.c.b16 %v1484, %v1480
    %v1537 = vpack.c.b16 %v1485, %v1481
    %v1538 = vpack.c.b16 %v1486, %v1482
    %v1539 = vpack.c.b16 %v1487, %v1483
    %v1540 = vpack.c.b16 %v1492, %v1488
    %v1541 = vpack.c.b16 %v1493, %v1489
    %v1542 = vpack.c.b16 %v1494, %v1490
    %v1543 = vpack.c.b16 %v1495, %v1491
    %v1544 = vpack.c.b16 %v1500, %v1496
    %v1545 = vpack.c.b16 %v1501, %v1497
    %v1546 = vpack.c.b16 %v1502, %v1498
    %v1547 = vpack.c.b16 %v1503, %v1499
    %v1548 = vpack.c.b16 %v1508, %v1504
    %v1549 = vpack.c.b16 %v1509, %v1505
    %v1550 = vpack.c.b16 %v1510, %v1506
    %v1551 = vpack.c.b16 %v1511, %v1507
    %v1552 = vpack.c.b16 %v1516, %v1512
    %v1553 = vpack.c.b16 %v1517, %v1513
    %v1554 = vpack.c.b16 %v1518, %v1514
    %v1555 = vpack.c.b16 %v1519, %v1515
    %v1556 = vpack.c.b16 %v1524, %v1520
    %v1557 = vpack.c.b16 %v1525, %v1521
    %v1558 = vpack.c.b16 %v1526, %v1522
    %v1559 = vpack.c.b16 %v1527, %v1523
    %1592 = vmatprep.subr.bf16.mxu0 %v1557
    %1593 = vmatpush1.bf16.msra.mxu0 %v1556
    %1594 = vmatprep.subr.bf16.mxu0 %v1553
    %1595 = vmatpush1.bf16.msra.mxu0 %v1552
    %1596 = vmatprep.subr.bf16.mxu0 %v1549
    %1597 = vmatpush1.bf16.msra.mxu0 %v1548
    %1598 = vmatprep.subr.bf16.mxu0 %v1545
    %1599 = vmatpush1.bf16.msra.mxu0 %v1544
    %1600 = vmatprep.subr.bf16.mxu0 %v1541
    %1601 = vmatpush1.bf16.msra.mxu0 %v1540
    %1602 = vmatprep.subr.bf16.mxu0 %v1537
    %1603 = vmatpush1.bf16.msra.mxu0 %v1536
    %1604 = vmatprep.subr.bf16.mxu0 %v1533
    %1605 = vmatpush1.bf16.msra.mxu0 %v1532
    %1606 = vmatprep.subr.bf16.mxu0 %v1529
    %1607 = vmatpush1.bf16.msra.mxu0 %v1528
    %1608 = vmatprep.subr.bf16.mxu0 0
    %1609 = vmatpush2.bf16.msra.mxu0 0
    %1610 = vmatprep.subr.bf16.mxu0 0
    %1611 = vmatpush2.bf16.msra.mxu0 0
    %1612 = vmatprep.subr.bf16.mxu0 0
    %1613 = vmatpush2.bf16.msra.mxu0 0
    %1614 = vmatprep.subr.bf16.mxu0 0
    %1615 = vmatpush2.bf16.msra.mxu0 0
    %1616 = vmatprep.subr.bf16.mxu0 0
    %1617 = vmatpush2.bf16.msra.mxu0 0
    %1618 = vmatprep.subr.bf16.mxu0 0
    %1619 = vmatpush2.bf16.msra.mxu0 0
    %1620 = vmatprep.subr.bf16.mxu0 0
    %1621 = vmatpush2.bf16.msra.mxu0 0
    %1622 = vmatprep.subr.bf16.mxu0 0
    %1623 = vmatpush2.bf16.msra.mxu0 0
    %1624 = vmatprep.mubr.bf16.mxu0 0
    %1625 = vmatmul.mubr.bf16.gmra.mxu0 %v1377
    %v1626 = vpop.f32.mrf.mxu0
    %v1627 = vadd.f32 %v1415, %v1626
    %v1628 = vpop.f32.mrf.mxu0
    %v1629 = vadd.f32 %v1419, %v1628
    %v1630 = vpop.f32.mrf.mxu0
    %v1631 = vpop.f32.mrf.mxu0
    %1632 = vdwg.mxu0
    %1633 = vmatprep.subr.bf16.mxu0 %v1559
    %1634 = vmatpush1.bf16.msra.mxu0 %v1558
    %1635 = vmatprep.subr.bf16.mxu0 %v1555
    %1636 = vmatpush1.bf16.msra.mxu0 %v1554
    %1637 = vmatprep.subr.bf16.mxu0 %v1551
    %1638 = vmatpush1.bf16.msra.mxu0 %v1550
    %1639 = vmatprep.subr.bf16.mxu0 %v1547
    %1640 = vmatpush1.bf16.msra.mxu0 %v1546
    %1641 = vmatprep.subr.bf16.mxu0 %v1543
    %1642 = vmatpush1.bf16.msra.mxu0 %v1542
    %1643 = vmatprep.subr.bf16.mxu0 %v1539
    %1644 = vmatpush1.bf16.msra.mxu0 %v1538
    %1645 = vmatprep.subr.bf16.mxu0 %v1535
    %1646 = vmatpush1.bf16.msra.mxu0 %v1534
    %1647 = vmatprep.subr.bf16.mxu0 %v1531
    %1648 = vmatpush1.bf16.msra.mxu0 %v1530
    %1649 = vmatprep.subr.bf16.mxu0 0
    %1650 = vmatpush2.bf16.msra.mxu0 0
    %1651 = vmatprep.subr.bf16.mxu0 0
    %1652 = vmatpush2.bf16.msra.mxu0 0
    %1653 = vmatprep.subr.bf16.mxu0 0
    %1654 = vmatpush2.bf16.msra.mxu0 0
    %1655 = vmatprep.subr.bf16.mxu0 0
    %1656 = vmatpush2.bf16.msra.mxu0 0
    %1657 = vmatprep.subr.bf16.mxu0 0
    %1658 = vmatpush2.bf16.msra.mxu0 0
    %1659 = vmatprep.subr.bf16.mxu0 0
    %1660 = vmatpush2.bf16.msra.mxu0 0
    %1661 = vmatprep.subr.bf16.mxu0 0
    %1662 = vmatpush2.bf16.msra.mxu0 0
    %1663 = vmatprep.subr.bf16.mxu0 0
    %1664 = vmatpush2.bf16.msra.mxu0 0
    %1665 = vmatprep.mubr.bf16.mxu0 0
    %1666 = vmatmul.mubr.bf16.gmra.mxu0 %v1377
    %v1667 = vpop.f32.mrf.mxu0
    %v1668 = vadd.f32 %v1423, %v1667
    %v1669 = vpop.f32.mrf.mxu0
    %v1670 = vadd.f32 %v1427, %v1669
    %v1671 = vpop.f32.mrf.mxu0
    %v1672 = vpop.f32.mrf.mxu0
    %1673 = vdwg.mxu0
    %1674 = vst [vmem:[#allocation11] sm:$0xff] %v1627
    %1675 = vst [vmem:[#allocation11 + $0x8] sm:$0xff] %v1629
    %1676 = vst [vmem:[#allocation11 + $0x10] sm:$0xff] %v1668
    %1677 = vst [vmem:[#allocation11 + $0x18] sm:$0xff] %v1670
    // Predicated region
    $region50: #{tpu_custom_call.1} parent=1 // pred_check
      _
    $region51: #{tpu_custom_call.1} parent=1 // pred_check_branch
      %1679 = sbr.rel (0) target = $region53
    $region52: #{tpu_custom_call.1} parent=1 // pred_region
      %s1681 = ssub.s32 512, 512
      %1682 = vsyncadd [#allocation4], %s1681
      %s1684 = sshll.u32 [#allocation11], 4
      %s1685 = int_to_ptr.vmem [resolvable:$true] %s1684
      %1687 = dma.vmem_to_hbm [thread:$0]  %s1685, 512, %s7, [#allocation4]
    $region53: #{tpu_custom_call.1} parent=1 // pred_fallthru
      _
    // Predicated region
    $region54: #{tpu_custom_call.1} parent=1 // pred_check
      _
    $region55: #{tpu_custom_call.1} parent=1 // pred_check_branch
      %1689 = sbr.rel (0) target = $region57
    $region56: #{tpu_custom_call.1} parent=1 // pred_region
      %1690 = dma.done [#allocation4], 512
    $region57: #{tpu_custom_call.1} parent=1 // pred_fallthru
      _
    %1691 = vsyncpa [#allocation3], 1
    %1692 = vsyncpa [#allocation6], 1
    %1693 = vsyncpa [#allocation9], 1
    %1694 = vsyncpa [#allocation4], 1

</llo_original>
